<compile_context>
chip_gen: v7x
topology: tpu7x:2x2x1
jax: 0.10.0
libtpu: 0.0.40
codegen_flags: <defaults>
</compile_context>

<pallas_src>
import numpy as np
import jax
import jax.numpy as jnp
from jax.experimental import pallas as pl
from jax.experimental.pallas import tpu as pltpu


def _round_up(x, m):
    return (x + m - 1) // m * m


def _upsample_matrix(out_size, in_size):
    """Row weights of nn.Upsample(mode='bilinear', align_corners=False)."""
    scale = in_size / out_size
    m = np.zeros((out_size, in_size), np.float32)
    for o in range(out_size):
        src = max((o + 0.5) * scale - 0.5, 0.0)
        i0 = min(int(np.floor(src)), in_size - 1)
        i1 = min(i0 + 1, in_size - 1)
        lam = src - i0
        m[o, i0] += 1.0 - lam
        m[o, i1] += lam
    return m


def _w_phase_weights(W, Wp, K, Cout):
    """Decompose the width bilinear upsample into, per output phase p = w % K,
    two (Wp*Cout,) weight rows applied to the conv result and its +/-1 column
    (clamped) lane shifts."""
    uw = _upsample_matrix(W, Wp)
    s = K // 2
    w0 = np.zeros((K, Wp * Cout), np.float32)
    w1 = np.zeros((K, Wp * Cout), np.float32)
    for p in range(K):
        for j in range(Wp):
            w = j * K + p
            j0 = max((w - s) // K, 0)
            j1 = min(j0 + 1, Wp - 1)
            a = uw[w, j0]
            b = 0.0 if j1 == j0 else uw[w, j1]
            w0[p, j * Cout:(j + 1) * Cout] = a
            w1[p, j * Cout:(j + 1) * Cout] = b
    return w0, w1


def down_block(x_nchw, w_hwio, b, pool_k=2, pool_type="max"):
    N, Cin, H, W = x_nchw.shape
    K = pool_k
    assert H % K == 0 and W % K == 0
    KH, KW, _, Cout = w_hwio.shape
    assert (KH, KW) == (3, 3)
    Hp, Wp = H // K, W // K
    KK = K * K
    Wpx = Wp + 2                       # conv-padded width
    OUT_ROWS = Hp * Wpx                # conv rows computed (incl. discarded pad cols)
    ORP = _round_up(OUT_ROWS, 8)
    R = _round_up(ORP + 2 * Wpx + 2, 8)   # rows per pooled/padded tap slab
    s = K // 2

    # ---- wrapper-side layout prep (one fused transpose/pad pass) ----
    # xv[t, n, ih*Wpx + jw, c] = x[n, c, (ih-1)*K + di, (jw-1)*K + dj], t = di*K + dj,
    # with zeros in the conv padding rows/cols (max/avg of zeros = 0 = pad value).
    xt = jnp.transpose(x_nchw, (0, 2, 3, 1)).astype(jnp.float32)            # NHWC
    xv = xt.reshape(N, Hp, K, Wp, K, Cin)
    xv = jnp.transpose(xv, (2, 4, 0, 1, 3, 5))                              # (K,K,N,Hp,Wp,Cin)
    xv = jnp.pad(xv, ((0, 0), (0, 0), (0, 0), (1, 1), (1, 1), (0, 0)))      # conv zero pad
    xv = xv.reshape(KK, N, (Hp + 2) * Wpx, Cin)
    xv = jnp.pad(xv, ((0, 0), (0, 0), (0, R - (Hp + 2) * Wpx), (0, 0)))

    # conv weights: per kernel row di, a (3*Cin, Cout) tile with rows ordered (dj, cin)
    wk = jnp.asarray(w_hwio, jnp.float32).reshape(3, 3 * Cin, Cout)
    brow = jnp.asarray(b, jnp.float32).reshape(1, Cout)
    uh = jnp.asarray(_upsample_matrix(H, Hp))                               # (H, Hp)
    w0_np, w1_np = _w_phase_weights(W, Wp, K, Cout)
    w0 = jnp.asarray(w0_np)                                                 # (K, Wp*Cout)
    w1 = jnp.asarray(w1_np)

    def kernel(xv_ref, wk_ref, b_ref, uh_ref, w0_ref, w1_ref, o_ref, conv_ref):
        # ---- pooling: elementwise reduce over the K*K tap slabs ----
        pooled = xv_ref[0]
        for t in range(1, KK):
            if pool_type == "avg":
                pooled = pooled + xv_ref[t]
            else:
                pooled = jnp.maximum(pooled, xv_ref[t])
        if pool_type == "avg":
            pooled = pooled * (1.0 / KK)          # (R, Cin) padded + spatially flattened

        # ---- 3x3 conv: 3 true (rows, 3*Cin) @ (3*Cin, Cout) matmuls ----
        acc = None
        for di in range(3):
            base = di * Wpx
            lhs = jnp.concatenate(
                [pooled[base + dj:base + dj + ORP, :] for dj in range(3)], axis=1)
            part = jnp.dot(lhs, wk_ref[di], preferred_element_type=jnp.float32)
            acc = part if acc is None else acc + part
        acc = jnp.maximum(acc + b_ref[...], 0.0)  # bias + ReLU, (ORP, Cout)
        conv_ref[...] = acc

        # ---- relayout (Hp*Wpx, Cout) -> (Hp, Wp*Cout): strided sublane reads ----
        A = jnp.concatenate(
            [conv_ref[pl.ds(j, Hp, stride=Wpx), :] for j in range(Wp)], axis=1)

        # ---- bilinear upsample along H: small (H, Hp) matmul ----
        T = jnp.dot(uh_ref[...], A, preferred_element_type=jnp.float32)     # (H, Wp*Cout)

        # ---- bilinear upsample along W: two lane-shifted FMAs per phase ----
        if Wp > 1:
            Tm1 = jnp.concatenate([T[:, :Cout], T[:, :(Wp - 1) * Cout]], axis=1)
            Tp1 = jnp.concatenate([T[:, Cout:], T[:, (Wp - 1) * Cout:]], axis=1)
        else:
            Tm1, Tp1 = T, T
        phases = []
        for p in range(K):
            a_src = Tm1 if p < s else T
            b_src = T if p < s else Tp1
            phases.append(a_src * w0_ref[p:p + 1, :] + b_src * w1_ref[p:p + 1, :])
        o_ref[...] = jnp.concatenate(phases, axis=1)   # (H, W*Cout), phase-major in W

    # VMEM budget: double-buffered blocks + weights + in-kernel working values, 2x margin
    fb = 4
    est = fb * (2 * KK * R * Cin + 2 * H * W * Cout
                + 2 * (9 * Cin * Cout + Cout + H * Hp + 2 * K * Wp * Cout)
                + ORP * Cout
                + R * Cin + ORP * (3 * Cin + 2 * Cout)
                + 3 * H * Wp * Cout + 2 * H * W * Cout)
    vmem_limit = int(min(64 * 2 ** 20, max(16 * 2 ** 20, 2 * est)))

    out_flat = pl.pallas_call(
        kernel,
        out_shape=jax.ShapeDtypeStruct((N, H, W * Cout), jnp.float32),
        grid_spec=pltpu.PrefetchScalarGridSpec(
            num_scalar_prefetch=0,
            grid=(N,),
            in_specs=[
                pl.BlockSpec((KK, None, R, Cin), lambda n: (0, n, 0, 0)),
                pl.BlockSpec((3, 3 * Cin, Cout), lambda n: (0, 0, 0)),
                pl.BlockSpec((1, Cout), lambda n: (0, 0)),
                pl.BlockSpec((H, Hp), lambda n: (0, 0)),
                pl.BlockSpec((K, Wp * Cout), lambda n: (0, 0)),
                pl.BlockSpec((K, Wp * Cout), lambda n: (0, 0)),
            ],
            out_specs=pl.BlockSpec((None, H, W * Cout), lambda n: (n, 0, 0)),
            scratch_shapes=[pltpu.VMEM((ORP, Cout), jnp.float32)],
        ),
        compiler_params=pltpu.CompilerParams(
            dimension_semantics=("parallel",),
            vmem_limit_bytes=vmem_limit),
    )(xv, wk, brow, uh, w0, w1)

    # kernel output is (N, H, [phase p][col j][chan c]); de-interleave + NCHW in one pass
    out = out_flat.reshape(N, H, K, Wp, Cout)
    out = jnp.transpose(out, (0, 4, 1, 3, 2)).reshape(N, Cout, H, W)
    return out


def down_block_reference(x_nchw, w_hwio, b, pool_k=2):
    """Pure-JAX reference with identical semantics (sanity check)."""
    N, Cin, H, W = x_nchw.shape
    Hp, Wp = H // pool_k, W // pool_k
    pooled = jax.lax.reduce_window(x_nchw, -jnp.inf, jax.lax.max,
                                   (1, 1, pool_k, pool_k), (1, 1, pool_k, pool_k), "VALID")
    w_oihw = jnp.transpose(w_hwio, (3, 2, 0, 1))
    conv = jax.lax.conv_general_dilated(pooled, w_oihw, (1, 1), ((1, 1), (1, 1)),
                                        dimension_numbers=("NCHW", "OIHW", "NCHW"))
    conv = jnp.maximum(conv + jnp.asarray(b)[None, :, None, None], 0.0)
    uh = jnp.asarray(_upsample_matrix(H, Hp))
    uw = jnp.asarray(_upsample_matrix(W, Wp))
    return jnp.einsum("hi,wj,ncij->nchw", uh, uw, conv)


if __name__ == "__main__":
    N, Cin, Cout, H, W, K = 2, 4, 8, 16, 16, 2
    key = jax.random.PRNGKey(0)
    kx, kw, kb = jax.random.split(key, 3)
    x = jax.random.normal(kx, (N, Cin, H, W), jnp.float32)
    w = jax.random.normal(kw, (3, 3, Cin, Cout), jnp.float32) * 0.1   # HWIO conv weights
    b = jax.random.normal(kb, (Cout,), jnp.float32) * 0.1

    out = jax.block_until_ready(down_block(x, w, b, pool_k=K))
    ref = jax.block_until_ready(down_block_reference(x, w, b, pool_k=K))

    assert out.shape == (N, Cout, H, W)
    np.testing.assert_allclose(np.asarray(out), np.asarray(ref), atol=1e-4, rtol=1e-4)
    print("KERNEL_OK")
</pallas_src>

<mosaic_0001>
module attributes {stable_mosaic.version = 11 : i64} {
  func.func @kernel(%arg0: i32, %arg1: memref<4x1x104x4xf32, #tpu.memory_space<vmem>>, %arg2: memref<3x12x8xf32, #tpu.memory_space<vmem>>, %arg3: memref<1x8xf32, #tpu.memory_space<vmem>>, %arg4: memref<16x8xf32, #tpu.memory_space<vmem>>, %arg5: memref<2x64xf32, #tpu.memory_space<vmem>>, %arg6: memref<2x64xf32, #tpu.memory_space<vmem>>, %arg7: memref<1x16x128xf32, #tpu.memory_space<vmem>>, %arg8: memref<80x8xf32, #tpu.memory_space<vmem>>) attributes {dimension_semantics = [#tpu.dimension_semantics<parallel>], iteration_bounds = array<i64: 2>, scalar_prefetch = 0 : i64, scratch_operands = 1 : i64, tpu.core_type = #tpu.core_type<tc>, window_params = [{transform_indices = @transform_0, window_bounds = array<i64: 4, 1, 104, 4>}, {pipeline_mode = #tpu.pipeline_mode<synchronous>, transform_indices = @transform_1, window_bounds = array<i64: 3, 12, 8>}, {pipeline_mode = #tpu.pipeline_mode<synchronous>, transform_indices = @transform_2, window_bounds = array<i64: 1, 8>}, {pipeline_mode = #tpu.pipeline_mode<synchronous>, transform_indices = @transform_3, window_bounds = array<i64: 16, 8>}, {pipeline_mode = #tpu.pipeline_mode<synchronous>, transform_indices = @transform_4, window_bounds = array<i64: 2, 64>}, {pipeline_mode = #tpu.pipeline_mode<synchronous>, transform_indices = @transform_5, window_bounds = array<i64: 2, 64>}, {transform_indices = @transform_6, window_bounds = array<i64: 1, 16, 128>}]} {
    %c0 = arith.constant 0 : index
    %c0_0 = arith.constant 0 : index
    %c0_1 = arith.constant 0 : index
    %c0_2 = arith.constant 0 : index
    %0 = vector.load %arg1[%c0, %c0_0, %c0_1, %c0_2] : memref<4x1x104x4xf32, #tpu.memory_space<vmem>>, vector<1x1x104x4xf32>
    %1 = vector.shape_cast %0 : vector<1x1x104x4xf32> to vector<104x4xf32>
    %c1 = arith.constant 1 : index
    %c0_3 = arith.constant 0 : index
    %c0_4 = arith.constant 0 : index
    %c0_5 = arith.constant 0 : index
    %2 = vector.load %arg1[%c1, %c0_3, %c0_4, %c0_5] : memref<4x1x104x4xf32, #tpu.memory_space<vmem>>, vector<1x1x104x4xf32>
    %3 = vector.shape_cast %2 : vector<1x1x104x4xf32> to vector<104x4xf32>
    %4 = arith.maximumf %1, %3 : vector<104x4xf32>
    %c2 = arith.constant 2 : index
    %c0_6 = arith.constant 0 : index
    %c0_7 = arith.constant 0 : index
    %c0_8 = arith.constant 0 : index
    %5 = vector.load %arg1[%c2, %c0_6, %c0_7, %c0_8] : memref<4x1x104x4xf32, #tpu.memory_space<vmem>>, vector<1x1x104x4xf32>
    %6 = vector.shape_cast %5 : vector<1x1x104x4xf32> to vector<104x4xf32>
    %7 = arith.maximumf %4, %6 : vector<104x4xf32>
    %c3 = arith.constant 3 : index
    %c0_9 = arith.constant 0 : index
    %c0_10 = arith.constant 0 : index
    %c0_11 = arith.constant 0 : index
    %8 = vector.load %arg1[%c3, %c0_9, %c0_10, %c0_11] : memref<4x1x104x4xf32, #tpu.memory_space<vmem>>, vector<1x1x104x4xf32>
    %9 = vector.shape_cast %8 : vector<1x1x104x4xf32> to vector<104x4xf32>
    %10 = arith.maximumf %7, %9 : vector<104x4xf32>
    %11 = vector.extract_strided_slice %10 {offsets = [0, 0], sizes = [80, 4], strides = [1, 1]} : vector<104x4xf32> to vector<80x4xf32>
    %12 = vector.extract_strided_slice %10 {offsets = [1, 0], sizes = [80, 4], strides = [1, 1]} : vector<104x4xf32> to vector<80x4xf32>
    %13 = vector.extract_strided_slice %10 {offsets = [2, 0], sizes = [80, 4], strides = [1, 1]} : vector<104x4xf32> to vector<80x4xf32>
    %14 = tpu.concatenate %11, %12, %13 in 1 : vector<80x4xf32>, vector<80x4xf32>, vector<80x4xf32> -> vector<80x12xf32>
    %c0_12 = arith.constant 0 : index
    %c0_13 = arith.constant 0 : index
    %c0_14 = arith.constant 0 : index
    %15 = vector.load %arg2[%c0_12, %c0_13, %c0_14] : memref<3x12x8xf32, #tpu.memory_space<vmem>>, vector<1x12x8xf32>
    %16 = vector.shape_cast %15 : vector<1x12x8xf32> to vector<12x8xf32>
    %cst = arith.constant dense<0.000000e+00> : vector<80x8xf32>
    %17 = tpu.matmul %14, %16, %cst {dimension_numbers = #tpu.dot_dimension_numbers<[1], [0], [0], [1], [0, 0, 1, 1], [], []>} : vector<80x12xf32>, vector<12x8xf32>, vector<80x8xf32> -> vector<80x8xf32>
    %18 = vector.extract_strided_slice %10 {offsets = [10, 0], sizes = [80, 4], strides = [1, 1]} : vector<104x4xf32> to vector<80x4xf32>
    %19 = vector.extract_strided_slice %10 {offsets = [11, 0], sizes = [80, 4], strides = [1, 1]} : vector<104x4xf32> to vector<80x4xf32>
    %20 = vector.extract_strided_slice %10 {offsets = [12, 0], sizes = [80, 4], strides = [1, 1]} : vector<104x4xf32> to vector<80x4xf32>
    %21 = tpu.concatenate %18, %19, %20 in 1 : vector<80x4xf32>, vector<80x4xf32>, vector<80x4xf32> -> vector<80x12xf32>
    %c1_15 = arith.constant 1 : index
    %c0_16 = arith.constant 0 : index
    %c0_17 = arith.constant 0 : index
    %22 = vector.load %arg2[%c1_15, %c0_16, %c0_17] : memref<3x12x8xf32, #tpu.memory_space<vmem>>, vector<1x12x8xf32>
    %23 = vector.shape_cast %22 : vector<1x12x8xf32> to vector<12x8xf32>
    %cst_18 = arith.constant dense<0.000000e+00> : vector<80x8xf32>
    %24 = tpu.matmul %21, %23, %cst_18 {dimension_numbers = #tpu.dot_dimension_numbers<[1], [0], [0], [1], [0, 0, 1, 1], [], []>} : vector<80x12xf32>, vector<12x8xf32>, vector<80x8xf32> -> vector<80x8xf32>
    %25 = arith.addf %17, %24 : vector<80x8xf32>
    %26 = vector.extract_strided_slice %10 {offsets = [20, 0], sizes = [80, 4], strides = [1, 1]} : vector<104x4xf32> to vector<80x4xf32>
    %27 = vector.extract_strided_slice %10 {offsets = [21, 0], sizes = [80, 4], strides = [1, 1]} : vector<104x4xf32> to vector<80x4xf32>
    %28 = vector.extract_strided_slice %10 {offsets = [22, 0], sizes = [80, 4], strides = [1, 1]} : vector<104x4xf32> to vector<80x4xf32>
    %29 = tpu.concatenate %26, %27, %28 in 1 : vector<80x4xf32>, vector<80x4xf32>, vector<80x4xf32> -> vector<80x12xf32>
    %c2_19 = arith.constant 2 : index
    %c0_20 = arith.constant 0 : index
    %c0_21 = arith.constant 0 : index
    %30 = vector.load %arg2[%c2_19, %c0_20, %c0_21] : memref<3x12x8xf32, #tpu.memory_space<vmem>>, vector<1x12x8xf32>
    %31 = vector.shape_cast %30 : vector<1x12x8xf32> to vector<12x8xf32>
    %cst_22 = arith.constant dense<0.000000e+00> : vector<80x8xf32>
    %32 = tpu.matmul %29, %31, %cst_22 {dimension_numbers = #tpu.dot_dimension_numbers<[1], [0], [0], [1], [0, 0, 1, 1], [], []>} : vector<80x12xf32>, vector<12x8xf32>, vector<80x8xf32> -> vector<80x8xf32>
    %33 = arith.addf %25, %32 : vector<80x8xf32>
    %c0_23 = arith.constant 0 : index
    %c0_24 = arith.constant 0 : index
    %34 = vector.load %arg3[%c0_23, %c0_24] : memref<1x8xf32, #tpu.memory_space<vmem>>, vector<1x8xf32>
    %35 = vector.broadcast %34 : vector<1x8xf32> to vector<80x8xf32>
    %36 = arith.addf %33, %35 : vector<80x8xf32>
    %cst_25 = arith.constant 0.000000e+00 : f32
    %37 = vector.broadcast %cst_25 : f32 to vector<80x8xf32>
    %38 = arith.maximumf %36, %37 : vector<80x8xf32>
    %c0_26 = arith.constant 0 : index
    %c0_27 = arith.constant 0 : index
    %39 = vector.load %arg8[%c0_26, %c0_27] : memref<80x8xf32, #tpu.memory_space<vmem>>, vector<80x8xf32>
    tpu.vector_store %arg8[%c0_26, %c0_27], %38 {strides = array<i32>} : memref<80x8xf32, #tpu.memory_space<vmem>>, vector<80x8xf32>,
    %c0_28 = arith.constant 0 : index
    %c0_29 = arith.constant 0 : index
    %40 = tpu.strided_load %arg8[%c0_28, %c0_29] {strides = array<i32: 10, 1>} : memref<80x8xf32, #tpu.memory_space<vmem>>, vector<8x8xf32>
    %c1_30 = arith.constant 1 : index
    %c0_31 = arith.constant 0 : index
    %41 = tpu.strided_load %arg8[%c1_30, %c0_31] {strides = array<i32: 10, 1>} : memref<80x8xf32, #tpu.memory_space<vmem>>, vector<8x8xf32>
    %c2_32 = arith.constant 2 : index
    %c0_33 = arith.constant 0 : index
    %42 = tpu.strided_load %arg8[%c2_32, %c0_33] {strides = array<i32: 10, 1>} : memref<80x8xf32, #tpu.memory_space<vmem>>, vector<8x8xf32>
    %c3_34 = arith.constant 3 : index
    %c0_35 = arith.constant 0 : index
    %43 = tpu.strided_load %arg8[%c3_34, %c0_35] {strides = array<i32: 10, 1>} : memref<80x8xf32, #tpu.memory_space<vmem>>, vector<8x8xf32>
    %c4 = arith.constant 4 : index
    %c0_36 = arith.constant 0 : index
    %44 = tpu.strided_load %arg8[%c4, %c0_36] {strides = array<i32: 10, 1>} : memref<80x8xf32, #tpu.memory_space<vmem>>, vector<8x8xf32>
    %c5 = arith.constant 5 : index
    %c0_37 = arith.constant 0 : index
    %45 = tpu.strided_load %arg8[%c5, %c0_37] {strides = array<i32: 10, 1>} : memref<80x8xf32, #tpu.memory_space<vmem>>, vector<8x8xf32>
    %c6 = arith.constant 6 : index
    %c0_38 = arith.constant 0 : index
    %46 = tpu.strided_load %arg8[%c6, %c0_38] {strides = array<i32: 10, 1>} : memref<80x8xf32, #tpu.memory_space<vmem>>, vector<8x8xf32>
    %c7 = arith.constant 7 : index
    %c0_39 = arith.constant 0 : index
    %47 = tpu.strided_load %arg8[%c7, %c0_39] {strides = array<i32: 10, 1>} : memref<80x8xf32, #tpu.memory_space<vmem>>, vector<8x8xf32>
    %48 = tpu.concatenate %40, %41, %42, %43, %44, %45, %46, %47 in 1 : vector<8x8xf32>, vector<8x8xf32>, vector<8x8xf32>, vector<8x8xf32>, vector<8x8xf32>, vector<8x8xf32>, vector<8x8xf32>, vector<8x8xf32> -> vector<8x64xf32>
    %c0_40 = arith.constant 0 : index
    %c0_41 = arith.constant 0 : index
    %49 = vector.load %arg4[%c0_40, %c0_41] : memref<16x8xf32, #tpu.memory_space<vmem>>, vector<16x8xf32>
    %cst_42 = arith.constant dense<0.000000e+00> : vector<16x64xf32>
    %50 = tpu.matmul %49, %48, %cst_42 {dimension_numbers = #tpu.dot_dimension_numbers<[1], [0], [0], [1], [0, 0, 1, 1], [], []>} : vector<16x8xf32>, vector<8x64xf32>, vector<16x64xf32> -> vector<16x64xf32>
    %51 = vector.extract_strided_slice %50 {offsets = [0, 0], sizes = [16, 8], strides = [1, 1]} : vector<16x64xf32> to vector<16x8xf32>
    %52 = vector.extract_strided_slice %50 {offsets = [0, 0], sizes = [16, 56], strides = [1, 1]} : vector<16x64xf32> to vector<16x56xf32>
    %53 = tpu.concatenate %51, %52 in 1 : vector<16x8xf32>, vector<16x56xf32> -> vector<16x64xf32>
    %54 = vector.extract_strided_slice %50 {offsets = [0, 8], sizes = [16, 56], strides = [1, 1]} : vector<16x64xf32> to vector<16x56xf32>
    %55 = vector.extract_strided_slice %50 {offsets = [0, 56], sizes = [16, 8], strides = [1, 1]} : vector<16x64xf32> to vector<16x8xf32>
    %56 = tpu.concatenate %54, %55 in 1 : vector<16x56xf32>, vector<16x8xf32> -> vector<16x64xf32>
    %c0_43 = arith.constant 0 : index
    %c0_44 = arith.constant 0 : index
    %57 = vector.load %arg5[%c0_43, %c0_44] : memref<2x64xf32, #tpu.memory_space<vmem>>, vector<1x64xf32>
    %58 = vector.broadcast %57 : vector<1x64xf32> to vector<16x64xf32>
    %59 = arith.mulf %53, %58 : vector<16x64xf32>
    %c0_45 = arith.constant 0 : index
    %c0_46 = arith.constant 0 : index
    %60 = vector.load %arg6[%c0_45, %c0_46] : memref<2x64xf32, #tpu.memory_space<vmem>>, vector<1x64xf32>
    %61 = vector.broadcast %60 : vector<1x64xf32> to vector<16x64xf32>
    %62 = arith.mulf %50, %61 : vector<16x64xf32>
    %63 = arith.addf %59, %62 : vector<16x64xf32>
    %c1_47 = arith.constant 1 : index
    %c0_48 = arith.constant 0 : index
    %64 = vector.load %arg5[%c1_47, %c0_48] : memref<2x64xf32, #tpu.memory_space<vmem>>, vector<1x64xf32>
    %65 = vector.broadcast %64 : vector<1x64xf32> to vector<16x64xf32>
    %66 = arith.mulf %50, %65 : vector<16x64xf32>
    %c1_49 = arith.constant 1 : index
    %c0_50 = arith.constant 0 : index
    %67 = vector.load %arg6[%c1_49, %c0_50] : memref<2x64xf32, #tpu.memory_space<vmem>>, vector<1x64xf32>
    %68 = vector.broadcast %67 : vector<1x64xf32> to vector<16x64xf32>
    %69 = arith.mulf %56, %68 : vector<16x64xf32>
    %70 = arith.addf %66, %69 : vector<16x64xf32>
    %71 = tpu.concatenate %63, %70 in 1 : vector<16x64xf32>, vector<16x64xf32> -> vector<16x128xf32>
    %c0_51 = arith.constant 0 : index
    %c0_52 = arith.constant 0 : index
    %c0_53 = arith.constant 0 : index
    %72 = vector.load %arg7[%c0_51, %c0_52, %c0_53] : memref<1x16x128xf32, #tpu.memory_space<vmem>>, vector<1x16x128xf32>
    %73 = vector.shape_cast %72 : vector<1x16x128xf32> to vector<16x128xf32>
    %74 = vector.shape_cast %71 : vector<16x128xf32> to vector<1x16x128xf32>
    tpu.vector_store %arg7[%c0_51, %c0_52, %c0_53], %74 {strides = array<i32>} : memref<1x16x128xf32, #tpu.memory_space<vmem>>, vector<1x16x128xf32>,
    return
  }
  func.func @transform_0(%arg0: i32) -> (i32, i32, i32, i32) {
    %c0_i32 = arith.constant 0 : i32
    %c0_i32_0 = arith.constant 0 : i32
    %c0_i32_1 = arith.constant 0 : i32
    %c0_i32_2 = arith.constant 0 : i32
    return %c0_i32, %arg0, %c0_i32_0, %c0_i32_1 : i32, i32, i32, i32
  }
  func.func @transform_1(%arg0: i32) -> (i32, i32, i32) {
    %c0_i32 = arith.constant 0 : i32
    %c0_i32_0 = arith.constant 0 : i32
    %c0_i32_1 = arith.constant 0 : i32
    %c0_i32_2 = arith.constant 0 : i32
    return %c0_i32, %c0_i32_0, %c0_i32_1 : i32, i32, i32
  }
  func.func @transform_2(%arg0: i32) -> (i32, i32) {
    %c0_i32 = arith.constant 0 : i32
    %c0_i32_0 = arith.constant 0 : i32
    %c0_i32_1 = arith.constant 0 : i32
    return %c0_i32, %c0_i32_0 : i32, i32
  }
  func.func @transform_3(%arg0: i32) -> (i32, i32) {
    %c0_i32 = arith.constant 0 : i32
    %c0_i32_0 = arith.constant 0 : i32
    %c0_i32_1 = arith.constant 0 : i32
    return %c0_i32, %c0_i32_0 : i32, i32
  }
  func.func @transform_4(%arg0: i32) -> (i32, i32) {
    %c0_i32 = arith.constant 0 : i32
    %c0_i32_0 = arith.constant 0 : i32
    %c0_i32_1 = arith.constant 0 : i32
    return %c0_i32, %c0_i32_0 : i32, i32
  }
  func.func @transform_5(%arg0: i32) -> (i32, i32) {
    %c0_i32 = arith.constant 0 : i32
    %c0_i32_0 = arith.constant 0 : i32
    %c0_i32_1 = arith.constant 0 : i32
    return %c0_i32, %c0_i32_0 : i32, i32
  }
  func.func @transform_6(%arg0: i32) -> (i32, i32, i32) {
    %c0_i32 = arith.constant 0 : i32
    %c0_i32_0 = arith.constant 0 : i32
    %c0_i32_1 = arith.constant 0 : i32
    return %arg0, %c0_i32, %c0_i32_0 : i32, i32, i32
  }
}

</mosaic_0001>

<llo_original>
// kernel: tpu_custom_call.1
$region0: #{tpu_custom_call.1}
  #allocation0 [shape = 'u32[]', space=smem, size = 0x4, offset = 0x4, fixed_abs, tag = 'smem constant byte address 0x4 - core index']
  #allocation1 [shape = 'u32[144,128]{1,0:T(1,128)}', space=vmem, size = 0x12000, scoped, tag = 'internal scratch']
  #allocation2 [shape = 'f32[80,8]{1,0:T(8,128)}', space=vmem, size = 0xa000, scoped, tag = 'scratch operand']
  %s0 = inlined_call_operand.vmem [shape: f32[4,2,104,4], index: 0, kind: input, shape index: {}]
  %s1 = inlined_call_operand.vmem [shape: f32[3,12,8], index: 1, kind: input, shape index: {}]
  %s2 = inlined_call_operand.vmem [shape: f32[1,8], index: 2, kind: input, shape index: {}]
  %s3 = inlined_call_operand.vmem [shape: f32[16,8], index: 3, kind: input, shape index: {}]
  %s4 = inlined_call_operand.vmem [shape: f32[2,64], index: 4, kind: input, shape index: {}]
  %s5 = inlined_call_operand.vmem [shape: f32[2,64], index: 5, kind: input, shape index: {}]
  %s6 = inlined_call_operand.hbm [shape: f32[2,16,128], index: 6, kind: output, shape index: {}]
  %s7 = sld [smem:[#allocation0]]
  $region95: #{tpu_custom_call.1} parent=0
    _
  %s9 = ssub.s32 1, %s7
  %s10 = scalar_select 0, %s9, %s7
  $region1: #{tpu_custom_call.1} parent=0
    #allocation3 [shape = 'u8[425984]{0}', space=vmem, size = 0x68000, scoped, tag = 'input window, operand 0']
    #allocation4 [shape = 'u8[16384]{0}', space=vmem, size = 0x4000, scoped, tag = 'output window, operand 0']
    #allocation5 [shape = 's32[2]{0}', space=sflag, size = 0x8, scoped, tag = 'scoped memory for tpu_custom_call.1']
    %11 = vsyncpa [#allocation5], 0
    %s12 = scalar_lea.sflag [#allocation5], 1
    %13 = vsyncpa %s12, 0
    loop: start=0, step=1, limit=4
    $region2: #{tpu_custom_call.1} parent=1 // loop_pre_header
      _
    $region3: #{tpu_custom_call.1} parent=1 // loop_header
      %s15 = sphi 0, %s19
      %p16 = scmp.ge.s32.totalorder %s15, 4
      %s25 = sphi 0, %s27
      %s28 = sphi 0, %s25
      %s29 = sphi 0, %s28
      %s45 = sphi 0, %s29
      %s49 = sphi 0, %s49
      %s51 = sphi 0, %s49
      %s52 = sphi 0, %s51
      %s66 = sphi 0, %s52
      %s70 = sphi 0, %s70
      %s72 = sphi 0, %s70
      %s73 = sphi 0, %s72
      %s87 = sphi 0, %s73
      %s91 = sphi 0, %s91
      %s93 = sphi 0, %s91
      %s94 = sphi 0, %s93
      %s108 = sphi 0, %s94
      %s112 = sphi 0, %s112
      %s114 = sphi 0, %s112
      %s115 = sphi 0, %s114
      %s129 = sphi 0, %s115
      %s133 = sphi 0, %s133
      %s135 = sphi 0, %s133
      %s136 = sphi 0, %s135
      %s150 = sphi 0, %s136
      %s156 = sphi 0, %s158
      %s159 = sphi 0, %s156
      %s160 = sphi 0, %s159
      %s176 = sphi 0, %s160
    $region4: #{tpu_custom_call.1} parent=1 // loop_header_branch
      %18 = sbr.rel (%p16) target = $region8
    $region5: #{tpu_custom_call.1} parent=1 // loop_body
      %s20 = ssub.s32 %s15, 1
      %s21 = ssub.s32 %s15, 2
      %s22 = sadd.s32 %s15, 1
      %s23 = ssub.s32 %s15, %s22
      %p24 = scmp.eq.s32.totalorder %s23, 0
      %s26 = sadd.s32 %s25, 1
      %s27 = scalar_select %p24, %s25, %s26
      %p30 = pneg %p24
      %p31 = scmp.eq.s32.totalorder %s15, 1
      %p32 = por %p30, %p31
      %p33 = scmp.ne.s32.totalorder %s25, %s28
      %p34 = scmp.eq.s32.totalorder %s15, 0
      %p35 = por %p33, %p34
      %p36 = scmp.ne.s32.totalorder %s25, %s28
      %p37 = scmp.eq.s32.totalorder %s20, 1
      %p38 = por %p36, %p37
      %p39 = scmp.ne.s32.totalorder %s28, %s29
      %p40 = scmp.eq.s32.totalorder %s20, 0
      %p41 = por %p39, %p40
      %p42 = scmp.ne.s32.totalorder %s28, %s29
      %p43 = scmp.eq.s32.totalorder %s21, 1
      %p44 = por %p42, %p43
      %p46 = scmp.ne.s32.totalorder %s29, %s45
      %p47 = scmp.eq.s32.totalorder %s21, 0
      %p48 = por %p46, %p47
      %s50 = sadd.s32 %s49, 1
      %p53 = scmp.eq.s32.totalorder %s15, 1
      %p54 = scmp.ne.s32.totalorder %s49, %s51
      %p55 = scmp.eq.s32.totalorder %s15, 0
      %p56 = por %p54, %p55
      %p57 = scmp.ne.s32.totalorder %s49, %s51
      %p58 = scmp.eq.s32.totalorder %s20, 1
      %p59 = por %p57, %p58
      %p60 = scmp.ne.s32.totalorder %s51, %s52
      %p61 = scmp.eq.s32.totalorder %s20, 0
      %p62 = por %p60, %p61
      %p63 = scmp.ne.s32.totalorder %s51, %s52
      %p64 = scmp.eq.s32.totalorder %s21, 1
      %p65 = por %p63, %p64
      %p67 = scmp.ne.s32.totalorder %s52, %s66
      %p68 = scmp.eq.s32.totalorder %s21, 0
      %p69 = por %p67, %p68
      %s71 = sadd.s32 %s70, 1
      %p74 = scmp.eq.s32.totalorder %s15, 1
      %p75 = scmp.ne.s32.totalorder %s70, %s72
      %p76 = scmp.eq.s32.totalorder %s15, 0
      %p77 = por %p75, %p76
      %p78 = scmp.ne.s32.totalorder %s70, %s72
      %p79 = scmp.eq.s32.totalorder %s20, 1
      %p80 = por %p78, %p79
      %p81 = scmp.ne.s32.totalorder %s72, %s73
      %p82 = scmp.eq.s32.totalorder %s20, 0
      %p83 = por %p81, %p82
      %p84 = scmp.ne.s32.totalorder %s72, %s73
      %p85 = scmp.eq.s32.totalorder %s21, 1
      %p86 = por %p84, %p85
      %p88 = scmp.ne.s32.totalorder %s73, %s87
      %p89 = scmp.eq.s32.totalorder %s21, 0
      %p90 = por %p88, %p89
      %s92 = sadd.s32 %s91, 1
      %p95 = scmp.eq.s32.totalorder %s15, 1
      %p96 = scmp.ne.s32.totalorder %s91, %s93
      %p97 = scmp.eq.s32.totalorder %s15, 0
      %p98 = por %p96, %p97
      %p99 = scmp.ne.s32.totalorder %s91, %s93
      %p100 = scmp.eq.s32.totalorder %s20, 1
      %p101 = por %p99, %p100
      %p102 = scmp.ne.s32.totalorder %s93, %s94
      %p103 = scmp.eq.s32.totalorder %s20, 0
      %p104 = por %p102, %p103
      %p105 = scmp.ne.s32.totalorder %s93, %s94
      %p106 = scmp.eq.s32.totalorder %s21, 1
      %p107 = por %p105, %p106
      %p109 = scmp.ne.s32.totalorder %s94, %s108
      %p110 = scmp.eq.s32.totalorder %s21, 0
      %p111 = por %p109, %p110
      %s113 = sadd.s32 %s112, 1
      %p116 = scmp.eq.s32.totalorder %s15, 1
      %p117 = scmp.ne.s32.totalorder %s112, %s114
      %p118 = scmp.eq.s32.totalorder %s15, 0
      %p119 = por %p117, %p118
      %p120 = scmp.ne.s32.totalorder %s112, %s114
      %p121 = scmp.eq.s32.totalorder %s20, 1
      %p122 = por %p120, %p121
      %p123 = scmp.ne.s32.totalorder %s114, %s115
      %p124 = scmp.eq.s32.totalorder %s20, 0
      %p125 = por %p123, %p124
      %p126 = scmp.ne.s32.totalorder %s114, %s115
      %p127 = scmp.eq.s32.totalorder %s21, 1
      %p128 = por %p126, %p127
      %p130 = scmp.ne.s32.totalorder %s115, %s129
      %p131 = scmp.eq.s32.totalorder %s21, 0
      %p132 = por %p130, %p131
      %s134 = sadd.s32 %s133, 1
      %p137 = scmp.eq.s32.totalorder %s15, 1
      %p138 = scmp.ne.s32.totalorder %s133, %s135
      %p139 = scmp.eq.s32.totalorder %s15, 0
      %p140 = por %p138, %p139
      %p141 = scmp.ne.s32.totalorder %s133, %s135
      %p142 = scmp.eq.s32.totalorder %s20, 1
      %p143 = por %p141, %p142
      %p144 = scmp.ne.s32.totalorder %s135, %s136
      %p145 = scmp.eq.s32.totalorder %s20, 0
      %p146 = por %p144, %p145
      %p147 = scmp.ne.s32.totalorder %s135, %s136
      %p148 = scmp.eq.s32.totalorder %s21, 1
      %p149 = por %p147, %p148
      %p151 = scmp.ne.s32.totalorder %s136, %s150
      %p152 = scmp.eq.s32.totalorder %s21, 0
      %p153 = por %p151, %p152
      %s154 = ssub.s32 %s15, %s22
      %p155 = scmp.eq.s32.totalorder %s154, 0
      %s157 = sadd.s32 %s156, 1
      %s158 = scalar_select %p155, %s156, %s157
      %p161 = pneg %p155
      %p162 = scmp.eq.s32.totalorder %s15, 1
      %p163 = por %p161, %p162
      %p164 = scmp.ne.s32.totalorder %s156, %s159
      %p165 = scmp.eq.s32.totalorder %s15, 0
      %p166 = por %p164, %p165
      %p167 = scmp.ne.s32.totalorder %s156, %s159
      %p168 = scmp.eq.s32.totalorder %s20, 1
      %p169 = por %p167, %p168
      %p170 = scmp.ne.s32.totalorder %s159, %s160
      %p171 = scmp.eq.s32.totalorder %s20, 0
      %p172 = por %p170, %p171
      %p173 = scmp.ne.s32.totalorder %s159, %s160
      %p174 = scmp.eq.s32.totalorder %s21, 1
      %p175 = por %p173, %p174
      %p177 = scmp.ne.s32.totalorder %s160, %s176
      %p178 = scmp.eq.s32.totalorder %s21, 0
      %p179 = por %p177, %p178
      %p180 = scmp.le.s32.totalorder 1, %s15
      %p181 = scmp.lt.s32.totalorder %s15, 3
      %p182 = pnand %p180, %p181
      %p183 = pneg %p182
      // Predicated region
      $region9: #{tpu_custom_call.1} parent=5 // pred_check
        _
      $region10: #{tpu_custom_call.1} parent=5 // pred_check_branch
        %185 = sbr.rel (%p182) target = $region12
      $region11: #{tpu_custom_call.1} parent=5 // pred_region
        %s186 = ssub.s32 %s15, 1
        // Predicated region
        $region13: #{tpu_custom_call.1} parent=11 // pred_check
          %p187 = pneg %p62
        $region14: #{tpu_custom_call.1} parent=11 // pred_check_branch
          %189 = sbr.rel (%p187) target = $region16
        $region15: #{tpu_custom_call.1} parent=11 // pred_region
          _
        $region16: #{tpu_custom_call.1} parent=11 // pred_fallthru
          _
        // Predicated region
        $region17: #{tpu_custom_call.1} parent=11 // pred_check
          %p190 = pneg %p83
        $region18: #{tpu_custom_call.1} parent=11 // pred_check_branch
          %192 = sbr.rel (%p190) target = $region20
        $region19: #{tpu_custom_call.1} parent=11 // pred_region
          _
        $region20: #{tpu_custom_call.1} parent=11 // pred_fallthru
          _
        // Predicated region
        $region21: #{tpu_custom_call.1} parent=11 // pred_check
          %p193 = pneg %p104
        $region22: #{tpu_custom_call.1} parent=11 // pred_check_branch
          %195 = sbr.rel (%p193) target = $region24
        $region23: #{tpu_custom_call.1} parent=11 // pred_region
          _
        $region24: #{tpu_custom_call.1} parent=11 // pred_fallthru
          _
        // Predicated region
        $region25: #{tpu_custom_call.1} parent=11 // pred_check
          %p196 = pneg %p125
        $region26: #{tpu_custom_call.1} parent=11 // pred_check_branch
          %198 = sbr.rel (%p196) target = $region28
        $region27: #{tpu_custom_call.1} parent=11 // pred_region
          _
        $region28: #{tpu_custom_call.1} parent=11 // pred_fallthru
          _
        // Predicated region
        $region29: #{tpu_custom_call.1} parent=11 // pred_check
          %p199 = pneg %p146
        $region30: #{tpu_custom_call.1} parent=11 // pred_check_branch
          %201 = sbr.rel (%p199) target = $region32
        $region31: #{tpu_custom_call.1} parent=11 // pred_region
          _
        $region32: #{tpu_custom_call.1} parent=11 // pred_fallthru
          _
      $region12: #{tpu_custom_call.1} parent=5 // pred_fallthru
        _
      %p202 = scmp.lt.s32.totalorder %s15, 2
      // Predicated region
      $region33: #{tpu_custom_call.1} parent=5 // pred_check
        %p203 = pneg %p202
      $region34: #{tpu_custom_call.1} parent=5 // pred_check_branch
        %205 = sbr.rel (%p203) target = $region36
      $region35: #{tpu_custom_call.1} parent=5 // pred_region
        // Predicated region
        $region37: #{tpu_custom_call.1} parent=35 // pred_check
          %p206 = pneg %p35
        $region38: #{tpu_custom_call.1} parent=35 // pred_check_branch
          %208 = sbr.rel (%p206) target = $region40
        $region39: #{tpu_custom_call.1} parent=35 // pred_region
          %s209 = sand.u32 %s25, 1
          %s210 = sand.u32 %s25, 1
          %s211 = smul.addr %s210, 416
          %s212 = scalar_lea.vmem [#allocation3], %s211
          %s213 = smul.addr %s15, 13
          %s214 = smul.addr %s213, 8
          %s215 = scalar_lea.vmem %s0, %s214
          // Predicated region
          $region41: #{tpu_custom_call.1} parent=39 // pred_check
            _
          $region42: #{tpu_custom_call.1} parent=39 // pred_check_branch
            %217 = sbr.rel (0) target = $region44
          $region43: #{tpu_custom_call.1} parent=39 // pred_region
            // Predicated region
            $region45: #{tpu_custom_call.1} parent=43 // pred_check
              _
            $region46: #{tpu_custom_call.1} parent=43 // pred_check_branch
              %219 = sbr.rel (0) target = $region48
            $region47: #{tpu_custom_call.1} parent=43 // pred_region
              // Predicated region
              $region60: #{tpu_custom_call.1} parent=47 // pred_check
                _
              $region61: #{tpu_custom_call.1} parent=47 // pred_check_branch
                %336 = sbr.rel (0) target = $region63
              $region62: #{tpu_custom_call.1} parent=47 // pred_region
                loop: start=0, step=1, limit=1
                $region64: #{tpu_custom_call.1} parent=62 // loop_pre_header
                  _
                $region65: #{tpu_custom_call.1} parent=62 // loop_header
                  %s338 = sphi 0, %s342
                  %p339 = scmp.ge.s32.totalorder %s338, 1
                  %s343 = sphi %s215, %s215
                  %s344 = sphi %s212, %s212
                $region66: #{tpu_custom_call.1} parent=62 // loop_header_branch
                  %341 = sbr.rel (%p339) target = $region70
                $region67: #{tpu_custom_call.1} parent=62 // loop_body
                  %v345 = vld [vmem:[%s343] sm:$0xff]
                  %346 = vst [vmem:[%s344] sm:$0xff] %v345
                  %v347 = vld [vmem:[%s343 + $0x8] sm:$0xff]
                  %348 = vst [vmem:[%s344 + $0x8] sm:$0xff] %v347
                  %v349 = vld [vmem:[%s343 + $0x10] sm:$0xff]
                  %350 = vst [vmem:[%s344 + $0x10] sm:$0xff] %v349
                  %v351 = vld [vmem:[%s343 + $0x18] sm:$0xff]
                  %352 = vst [vmem:[%s344 + $0x18] sm:$0xff] %v351
                  %v353 = vld [vmem:[%s343 + $0x20] sm:$0xff]
                  %354 = vst [vmem:[%s344 + $0x20] sm:$0xff] %v353
                  %v355 = vld [vmem:[%s343 + $0x28] sm:$0xff]
                  %356 = vst [vmem:[%s344 + $0x28] sm:$0xff] %v355
                  %v357 = vld [vmem:[%s343 + $0x30] sm:$0xff]
                  %358 = vst [vmem:[%s344 + $0x30] sm:$0xff] %v357
                  %v359 = vld [vmem:[%s343 + $0x38] sm:$0xff]
                  %360 = vst [vmem:[%s344 + $0x38] sm:$0xff] %v359
                  %v361 = vld [vmem:[%s343 + $0x40] sm:$0xff]
                  %362 = vst [vmem:[%s344 + $0x40] sm:$0xff] %v361
                  %v363 = vld [vmem:[%s343 + $0x48] sm:$0xff]
                  %364 = vst [vmem:[%s344 + $0x48] sm:$0xff] %v363
                  %v365 = vld [vmem:[%s343 + $0x50] sm:$0xff]
                  %366 = vst [vmem:[%s344 + $0x50] sm:$0xff] %v365
                  %v367 = vld [vmem:[%s343 + $0x58] sm:$0xff]
                  %368 = vst [vmem:[%s344 + $0x58] sm:$0xff] %v367
                  %v369 = vld [vmem:[%s343 + $0x60] sm:$0xff]
                  %370 = vst [vmem:[%s344 + $0x60] sm:$0xff] %v369
                  %v371 = vld [vmem:[%s343 + $0xd0] sm:$0xff]
                  %372 = vst [vmem:[%s344 + $0x68] sm:$0xff] %v371
                  %v373 = vld [vmem:[%s343 + $0xd8] sm:$0xff]
                  %374 = vst [vmem:[%s344 + $0x70] sm:$0xff] %v373
                  %v375 = vld [vmem:[%s343 + $0xe0] sm:$0xff]
                  %376 = vst [vmem:[%s344 + $0x78] sm:$0xff] %v375
                  %v377 = vld [vmem:[%s343 + $0xe8] sm:$0xff]
                  %378 = vst [vmem:[%s344 + $0x80] sm:$0xff] %v377
                  %v379 = vld [vmem:[%s343 + $0xf0] sm:$0xff]
                  %380 = vst [vmem:[%s344 + $0x88] sm:$0xff] %v379
                  %v381 = vld [vmem:[%s343 + $0xf8] sm:$0xff]
                  %382 = vst [vmem:[%s344 + $0x90] sm:$0xff] %v381
                  %v383 = vld [vmem:[%s343 + $0x100] sm:$0xff]
                  %384 = vst [vmem:[%s344 + $0x98] sm:$0xff] %v383
                  %v385 = vld [vmem:[%s343 + $0x108] sm:$0xff]
                  %386 = vst [vmem:[%s344 + $0xa0] sm:$0xff] %v385
                  %v387 = vld [vmem:[%s343 + $0x110] sm:$0xff]
                  %388 = vst [vmem:[%s344 + $0xa8] sm:$0xff] %v387
                  %v389 = vld [vmem:[%s343 + $0x118] sm:$0xff]
                  %390 = vst [vmem:[%s344 + $0xb0] sm:$0xff] %v389
                  %v391 = vld [vmem:[%s343 + $0x120] sm:$0xff]
                  %392 = vst [vmem:[%s344 + $0xb8] sm:$0xff] %v391
                  %v393 = vld [vmem:[%s343 + $0x128] sm:$0xff]
                  %394 = vst [vmem:[%s344 + $0xc0] sm:$0xff] %v393
                  %v395 = vld [vmem:[%s343 + $0x130] sm:$0xff]
                  %396 = vst [vmem:[%s344 + $0xc8] sm:$0xff] %v395
                  %v397 = vld [vmem:[%s343 + $0x1a0] sm:$0xff]
                  %398 = vst [vmem:[%s344 + $0xd0] sm:$0xff] %v397
                  %v399 = vld [vmem:[%s343 + $0x1a8] sm:$0xff]
                  %400 = vst [vmem:[%s344 + $0xd8] sm:$0xff] %v399
                  %v401 = vld [vmem:[%s343 + $0x1b0] sm:$0xff]
                  %402 = vst [vmem:[%s344 + $0xe0] sm:$0xff] %v401
                  %v403 = vld [vmem:[%s343 + $0x1b8] sm:$0xff]
                  %404 = vst [vmem:[%s344 + $0xe8] sm:$0xff] %v403
                  %v405 = vld [vmem:[%s343 + $0x1c0] sm:$0xff]
                  %406 = vst [vmem:[%s344 + $0xf0] sm:$0xff] %v405
                  %v407 = vld [vmem:[%s343 + $0x1c8] sm:$0xff]
                  %408 = vst [vmem:[%s344 + $0xf8] sm:$0xff] %v407
                  %v409 = vld [vmem:[%s343 + $0x1d0] sm:$0xff]
                  %410 = vst [vmem:[%s344 + $0x100] sm:$0xff] %v409
                  %v411 = vld [vmem:[%s343 + $0x1d8] sm:$0xff]
                  %412 = vst [vmem:[%s344 + $0x108] sm:$0xff] %v411
                  %v413 = vld [vmem:[%s343 + $0x1e0] sm:$0xff]
                  %414 = vst [vmem:[%s344 + $0x110] sm:$0xff] %v413
                  %v415 = vld [vmem:[%s343 + $0x1e8] sm:$0xff]
                  %416 = vst [vmem:[%s344 + $0x118] sm:$0xff] %v415
                  %v417 = vld [vmem:[%s343 + $0x1f0] sm:$0xff]
                  %418 = vst [vmem:[%s344 + $0x120] sm:$0xff] %v417
                  %v419 = vld [vmem:[%s343 + $0x1f8] sm:$0xff]
                  %420 = vst [vmem:[%s344 + $0x128] sm:$0xff] %v419
                  %v421 = vld [vmem:[%s343 + $0x200] sm:$0xff]
                  %422 = vst [vmem:[%s344 + $0x130] sm:$0xff] %v421
                  %v423 = vld [vmem:[%s343 + $0x270] sm:$0xff]
                  %424 = vst [vmem:[%s344 + $0x138] sm:$0xff] %v423
                  %v425 = vld [vmem:[%s343 + $0x278] sm:$0xff]
                  %426 = vst [vmem:[%s344 + $0x140] sm:$0xff] %v425
                  %v427 = vld [vmem:[%s343 + $0x280] sm:$0xff]
                  %428 = vst [vmem:[%s344 + $0x148] sm:$0xff] %v427
                  %v429 = vld [vmem:[%s343 + $0x288] sm:$0xff]
                  %430 = vst [vmem:[%s344 + $0x150] sm:$0xff] %v429
                  %v431 = vld [vmem:[%s343 + $0x290] sm:$0xff]
                  %432 = vst [vmem:[%s344 + $0x158] sm:$0xff] %v431
                  %v433 = vld [vmem:[%s343 + $0x298] sm:$0xff]
                  %434 = vst [vmem:[%s344 + $0x160] sm:$0xff] %v433
                  %v435 = vld [vmem:[%s343 + $0x2a0] sm:$0xff]
                  %436 = vst [vmem:[%s344 + $0x168] sm:$0xff] %v435
                  %v437 = vld [vmem:[%s343 + $0x2a8] sm:$0xff]
                  %438 = vst [vmem:[%s344 + $0x170] sm:$0xff] %v437
                  %v439 = vld [vmem:[%s343 + $0x2b0] sm:$0xff]
                  %440 = vst [vmem:[%s344 + $0x178] sm:$0xff] %v439
                  %v441 = vld [vmem:[%s343 + $0x2b8] sm:$0xff]
                  %442 = vst [vmem:[%s344 + $0x180] sm:$0xff] %v441
                  %v443 = vld [vmem:[%s343 + $0x2c0] sm:$0xff]
                  %444 = vst [vmem:[%s344 + $0x188] sm:$0xff] %v443
                  %v445 = vld [vmem:[%s343 + $0x2c8] sm:$0xff]
                  %446 = vst [vmem:[%s344 + $0x190] sm:$0xff] %v445
                  %v447 = vld [vmem:[%s343 + $0x2d0] sm:$0xff]
                  %448 = vst [vmem:[%s344 + $0x198] sm:$0xff] %v447
                $region68: #{tpu_custom_call.1} parent=62 // loop_footer
                  %s342 = sadd.s32 1, %s338
                $region69: #{tpu_custom_call.1} parent=62 // loop_footer_branch
                  %337 = sbr.rel target = $region65
                $region70: #{tpu_custom_call.1} parent=62 // loop_exit
                  _
              $region63: #{tpu_custom_call.1} parent=47 // pred_fallthru
                _
              // Predicated region
              $region71: #{tpu_custom_call.1} parent=47 // pred_check
                _
              $region72: #{tpu_custom_call.1} parent=47 // pred_check_branch
                %450 = sbr.rel target = $region74
              $region73: #{tpu_custom_call.1} parent=47 // pred_region
                _
              $region74: #{tpu_custom_call.1} parent=47 // pred_fallthru
                _
            $region48: #{tpu_custom_call.1} parent=43 // pred_fallthru
              _
            // Predicated region
            $region49: #{tpu_custom_call.1} parent=43 // pred_check
              _
            $region50: #{tpu_custom_call.1} parent=43 // pred_check_branch
              %221 = sbr.rel target = $region52
            $region51: #{tpu_custom_call.1} parent=43 // pred_region
              loop: start=0, step=1, limit=1
              $region53: #{tpu_custom_call.1} parent=51 // loop_pre_header
                _
              $region54: #{tpu_custom_call.1} parent=51 // loop_header
                %s224 = sphi 0, %s228
                %p225 = scmp.ge.s32.totalorder %s224, 1
                %s229 = sphi %s215, %s215
                %s230 = sphi %s212, %s212
              $region55: #{tpu_custom_call.1} parent=51 // loop_header_branch
                %227 = sbr.rel (%p225) target = $region59
              $region56: #{tpu_custom_call.1} parent=51 // loop_body
                %v231 = vld [vmem:[%s229] sm:$0xff]
                %232 = vst [vmem:[%s230] sm:$0xff] %v231
                %v233 = vld [vmem:[%s229 + $0x8] sm:$0xff]
                %234 = vst [vmem:[%s230 + $0x8] sm:$0xff] %v233
                %v235 = vld [vmem:[%s229 + $0x10] sm:$0xff]
                %236 = vst [vmem:[%s230 + $0x10] sm:$0xff] %v235
                %v237 = vld [vmem:[%s229 + $0x18] sm:$0xff]
                %238 = vst [vmem:[%s230 + $0x18] sm:$0xff] %v237
                %v239 = vld [vmem:[%s229 + $0x20] sm:$0xff]
                %240 = vst [vmem:[%s230 + $0x20] sm:$0xff] %v239
                %v241 = vld [vmem:[%s229 + $0x28] sm:$0xff]
                %242 = vst [vmem:[%s230 + $0x28] sm:$0xff] %v241
                %v243 = vld [vmem:[%s229 + $0x30] sm:$0xff]
                %244 = vst [vmem:[%s230 + $0x30] sm:$0xff] %v243
                %v245 = vld [vmem:[%s229 + $0x38] sm:$0xff]
                %246 = vst [vmem:[%s230 + $0x38] sm:$0xff] %v245
                %v247 = vld [vmem:[%s229 + $0x40] sm:$0xff]
                %248 = vst [vmem:[%s230 + $0x40] sm:$0xff] %v247
                %v249 = vld [vmem:[%s229 + $0x48] sm:$0xff]
                %250 = vst [vmem:[%s230 + $0x48] sm:$0xff] %v249
                %v251 = vld [vmem:[%s229 + $0x50] sm:$0xff]
                %252 = vst [vmem:[%s230 + $0x50] sm:$0xff] %v251
                %v253 = vld [vmem:[%s229 + $0x58] sm:$0xff]
                %254 = vst [vmem:[%s230 + $0x58] sm:$0xff] %v253
                %v255 = vld [vmem:[%s229 + $0x60] sm:$0xff]
                %256 = vst [vmem:[%s230 + $0x60] sm:$0xff] %v255
                %v257 = vld [vmem:[%s229 + $0xd0] sm:$0xff]
                %258 = vst [vmem:[%s230 + $0x68] sm:$0xff] %v257
                %v259 = vld [vmem:[%s229 + $0xd8] sm:$0xff]
                %260 = vst [vmem:[%s230 + $0x70] sm:$0xff] %v259
                %v261 = vld [vmem:[%s229 + $0xe0] sm:$0xff]
                %262 = vst [vmem:[%s230 + $0x78] sm:$0xff] %v261
                %v263 = vld [vmem:[%s229 + $0xe8] sm:$0xff]
                %264 = vst [vmem:[%s230 + $0x80] sm:$0xff] %v263
                %v265 = vld [vmem:[%s229 + $0xf0] sm:$0xff]
                %266 = vst [vmem:[%s230 + $0x88] sm:$0xff] %v265
                %v267 = vld [vmem:[%s229 + $0xf8] sm:$0xff]
                %268 = vst [vmem:[%s230 + $0x90] sm:$0xff] %v267
                %v269 = vld [vmem:[%s229 + $0x100] sm:$0xff]
                %270 = vst [vmem:[%s230 + $0x98] sm:$0xff] %v269
                %v271 = vld [vmem:[%s229 + $0x108] sm:$0xff]
                %272 = vst [vmem:[%s230 + $0xa0] sm:$0xff] %v271
                %v273 = vld [vmem:[%s229 + $0x110] sm:$0xff]
                %274 = vst [vmem:[%s230 + $0xa8] sm:$0xff] %v273
                %v275 = vld [vmem:[%s229 + $0x118] sm:$0xff]
                %276 = vst [vmem:[%s230 + $0xb0] sm:$0xff] %v275
                %v277 = vld [vmem:[%s229 + $0x120] sm:$0xff]
                %278 = vst [vmem:[%s230 + $0xb8] sm:$0xff] %v277
                %v279 = vld [vmem:[%s229 + $0x128] sm:$0xff]
                %280 = vst [vmem:[%s230 + $0xc0] sm:$0xff] %v279
                %v281 = vld [vmem:[%s229 + $0x130] sm:$0xff]
                %282 = vst [vmem:[%s230 + $0xc8] sm:$0xff] %v281
                %v283 = vld [vmem:[%s229 + $0x1a0] sm:$0xff]
                %284 = vst [vmem:[%s230 + $0xd0] sm:$0xff] %v283
                %v285 = vld [vmem:[%s229 + $0x1a8] sm:$0xff]
                %286 = vst [vmem:[%s230 + $0xd8] sm:$0xff] %v285
                %v287 = vld [vmem:[%s229 + $0x1b0] sm:$0xff]
                %288 = vst [vmem:[%s230 + $0xe0] sm:$0xff] %v287
                %v289 = vld [vmem:[%s229 + $0x1b8] sm:$0xff]
                %290 = vst [vmem:[%s230 + $0xe8] sm:$0xff] %v289
                %v291 = vld [vmem:[%s229 + $0x1c0] sm:$0xff]
                %292 = vst [vmem:[%s230 + $0xf0] sm:$0xff] %v291
                %v293 = vld [vmem:[%s229 + $0x1c8] sm:$0xff]
                %294 = vst [vmem:[%s230 + $0xf8] sm:$0xff] %v293
                %v295 = vld [vmem:[%s229 + $0x1d0] sm:$0xff]
                %296 = vst [vmem:[%s230 + $0x100] sm:$0xff] %v295
                %v297 = vld [vmem:[%s229 + $0x1d8] sm:$0xff]
                %298 = vst [vmem:[%s230 + $0x108] sm:$0xff] %v297
                %v299 = vld [vmem:[%s229 + $0x1e0] sm:$0xff]
                %300 = vst [vmem:[%s230 + $0x110] sm:$0xff] %v299
                %v301 = vld [vmem:[%s229 + $0x1e8] sm:$0xff]
                %302 = vst [vmem:[%s230 + $0x118] sm:$0xff] %v301
                %v303 = vld [vmem:[%s229 + $0x1f0] sm:$0xff]
                %304 = vst [vmem:[%s230 + $0x120] sm:$0xff] %v303
                %v305 = vld [vmem:[%s229 + $0x1f8] sm:$0xff]
                %306 = vst [vmem:[%s230 + $0x128] sm:$0xff] %v305
                %v307 = vld [vmem:[%s229 + $0x200] sm:$0xff]
                %308 = vst [vmem:[%s230 + $0x130] sm:$0xff] %v307
                %v309 = vld [vmem:[%s229 + $0x270] sm:$0xff]
                %310 = vst [vmem:[%s230 + $0x138] sm:$0xff] %v309
                %v311 = vld [vmem:[%s229 + $0x278] sm:$0xff]
                %312 = vst [vmem:[%s230 + $0x140] sm:$0xff] %v311
                %v313 = vld [vmem:[%s229 + $0x280] sm:$0xff]
                %314 = vst [vmem:[%s230 + $0x148] sm:$0xff] %v313
                %v315 = vld [vmem:[%s229 + $0x288] sm:$0xff]
                %316 = vst [vmem:[%s230 + $0x150] sm:$0xff] %v315
                %v317 = vld [vmem:[%s229 + $0x290] sm:$0xff]
                %318 = vst [vmem:[%s230 + $0x158] sm:$0xff] %v317
                %v319 = vld [vmem:[%s229 + $0x298] sm:$0xff]
                %320 = vst [vmem:[%s230 + $0x160] sm:$0xff] %v319
                %v321 = vld [vmem:[%s229 + $0x2a0] sm:$0xff]
                %322 = vst [vmem:[%s230 + $0x168] sm:$0xff] %v321
                %v323 = vld [vmem:[%s229 + $0x2a8] sm:$0xff]
                %324 = vst [vmem:[%s230 + $0x170] sm:$0xff] %v323
                %v325 = vld [vmem:[%s229 + $0x2b0] sm:$0xff]
                %326 = vst [vmem:[%s230 + $0x178] sm:$0xff] %v325
                %v327 = vld [vmem:[%s229 + $0x2b8] sm:$0xff]
                %328 = vst [vmem:[%s230 + $0x180] sm:$0xff] %v327
                %v329 = vld [vmem:[%s229 + $0x2c0] sm:$0xff]
                %330 = vst [vmem:[%s230 + $0x188] sm:$0xff] %v329
                %v331 = vld [vmem:[%s229 + $0x2c8] sm:$0xff]
                %332 = vst [vmem:[%s230 + $0x190] sm:$0xff] %v331
                %v333 = vld [vmem:[%s229 + $0x2d0] sm:$0xff]
                %334 = vst [vmem:[%s230 + $0x198] sm:$0xff] %v333
              $region57: #{tpu_custom_call.1} parent=51 // loop_footer
                %s228 = sadd.s32 1, %s224
              $region58: #{tpu_custom_call.1} parent=51 // loop_footer_branch
                %223 = sbr.rel target = $region54
              $region59: #{tpu_custom_call.1} parent=51 // loop_exit
                _
            $region52: #{tpu_custom_call.1} parent=43 // pred_fallthru
              _
          $region44: #{tpu_custom_call.1} parent=39 // pred_fallthru
            _
          %451 = vnop
        $region40: #{tpu_custom_call.1} parent=35 // pred_fallthru
          _
      $region36: #{tpu_custom_call.1} parent=5 // pred_fallthru
        _
      %p452 = scmp.le.s32.totalorder 1, %s15
      %p453 = scmp.lt.s32.totalorder %s15, 3
      %p454 = pnand %p452, %p453
      %p455 = pneg %p454
      // Predicated region
      $region75: #{tpu_custom_call.1} parent=5 // pred_check
        _
      $region76: #{tpu_custom_call.1} parent=5 // pred_check_branch
        %457 = sbr.rel (%p454) target = $region78
      $region77: #{tpu_custom_call.1} parent=5 // pred_region
        %s458 = ssub.s32 %s15, 1
        %s459 = sand.u32 %s28, 1
        %s460 = sand.u32 %s28, 1
        %s461 = smul.addr %s460, 416
        %s462 = scalar_lea.vmem [#allocation3], %s461
        // Predicated region
        $region79: #{tpu_custom_call.1} parent=77 // pred_check
          %p463 = pneg %p41
        $region80: #{tpu_custom_call.1} parent=77 // pred_check_branch
          %465 = sbr.rel (%p463) target = $region82
        $region81: #{tpu_custom_call.1} parent=77 // pred_region
          _
        $region82: #{tpu_custom_call.1} parent=77 // pred_fallthru
          _
        %s466 = sand.u32 %s28, 1
        %s467 = sand.u32 %s28, 1
        %s468 = smul.addr %s467, 416
        %s469 = scalar_lea.vmem [#allocation3], %s468
        %p470 = pneg %p41
        %p471 = pneg %p38
        %p472 = pneg %p62
        %p473 = pneg %p59
        %p474 = pneg %p83
        %p475 = pneg %p80
        %p476 = pneg %p104
        %p477 = pneg %p101
        %p478 = pneg %p125
        %p479 = pneg %p122
        %p480 = pneg %p146
        %p481 = pneg %p143
        %p482 = pneg %p172
        %p483 = pneg %p169
        %s484 = sand.u32 %s159, 1
        %s485 = scalar_lea.sflag [#allocation5], %s484
        %s486 = sand.u32 %s159, 1
        %s487 = smul.addr %s486, 16
        %s488 = scalar_lea.vmem [#allocation4], %s487
        %v489 = vld [vmem:[%s462] sm:$0xff]
        %v490 = vld [vmem:[%s462 + $0x8] sm:$0xff]
        %v491 = vld [vmem:[%s462 + $0x10] sm:$0xff]
        %v492 = vld [vmem:[%s462 + $0x18] sm:$0xff]
        %v493 = vld [vmem:[%s462 + $0x20] sm:$0xff]
        %v494 = vld [vmem:[%s462 + $0x28] sm:$0xff]
        %v495 = vld [vmem:[%s462 + $0x30] sm:$0xff]
        %v496 = vld [vmem:[%s462 + $0x38] sm:$0xff]
        %v497 = vld [vmem:[%s462 + $0x40] sm:$0xff]
        %v498 = vld [vmem:[%s462 + $0x48] sm:$0xff]
        %v499 = vld [vmem:[%s462 + $0x50] sm:$0xff]
        %v500 = vld [vmem:[%s462 + $0x58] sm:$0xff]
        %v501 = vld [vmem:[%s462 + $0x60] sm:$0xff]
        %s502 = scalar_lea.vmem %s462, 104 [#allocation3]
        %v503 = vld [vmem:[%s502] sm:$0xff]
        %v504 = vld [vmem:[%s502 + $0x8] sm:$0xff]
        %v505 = vld [vmem:[%s502 + $0x10] sm:$0xff]
        %v506 = vld [vmem:[%s502 + $0x18] sm:$0xff]
        %v507 = vld [vmem:[%s502 + $0x20] sm:$0xff]
        %v508 = vld [vmem:[%s502 + $0x28] sm:$0xff]
        %v509 = vld [vmem:[%s502 + $0x30] sm:$0xff]
        %v510 = vld [vmem:[%s502 + $0x38] sm:$0xff]
        %v511 = vld [vmem:[%s502 + $0x40] sm:$0xff]
        %v512 = vld [vmem:[%s502 + $0x48] sm:$0xff]
        %v513 = vld [vmem:[%s502 + $0x50] sm:$0xff]
        %v514 = vld [vmem:[%s502 + $0x58] sm:$0xff]
        %v515 = vld [vmem:[%s502 + $0x60] sm:$0xff]
        %v516 = vmax.f32 %v489, %v503
        %v517 = vmax.f32 %v490, %v504
        %v518 = vmax.f32 %v491, %v505
        %v519 = vmax.f32 %v492, %v506
        %v520 = vmax.f32 %v493, %v507
        %v521 = vmax.f32 %v494, %v508
        %v522 = vmax.f32 %v495, %v509
        %v523 = vmax.f32 %v496, %v510
        %v524 = vmax.f32 %v497, %v511
        %v525 = vmax.f32 %v498, %v512
        %v526 = vmax.f32 %v499, %v513
        %v527 = vmax.f32 %v500, %v514
        %v528 = vmax.f32 %v501, %v515
        %s529 = scalar_lea.vmem %s462, 208 [#allocation3]
        %v530 = vld [vmem:[%s529] sm:$0xff]
        %v531 = vld [vmem:[%s529 + $0x8] sm:$0xff]
        %v532 = vld [vmem:[%s529 + $0x10] sm:$0xff]
        %v533 = vld [vmem:[%s529 + $0x18] sm:$0xff]
        %v534 = vld [vmem:[%s529 + $0x20] sm:$0xff]
        %v535 = vld [vmem:[%s529 + $0x28] sm:$0xff]
        %v536 = vld [vmem:[%s529 + $0x30] sm:$0xff]
        %v537 = vld [vmem:[%s529 + $0x38] sm:$0xff]
        %v538 = vld [vmem:[%s529 + $0x40] sm:$0xff]
        %v539 = vld [vmem:[%s529 + $0x48] sm:$0xff]
        %v540 = vld [vmem:[%s529 + $0x50] sm:$0xff]
        %v541 = vld [vmem:[%s529 + $0x58] sm:$0xff]
        %v542 = vld [vmem:[%s529 + $0x60] sm:$0xff]
        %v543 = vmax.f32 %v516, %v530
        %v544 = vmax.f32 %v517, %v531
        %v545 = vmax.f32 %v518, %v532
        %v546 = vmax.f32 %v519, %v533
        %v547 = vmax.f32 %v520, %v534
        %v548 = vmax.f32 %v521, %v535
        %v549 = vmax.f32 %v522, %v536
        %v550 = vmax.f32 %v523, %v537
        %v551 = vmax.f32 %v524, %v538
        %v552 = vmax.f32 %v525, %v539
        %v553 = vmax.f32 %v526, %v540
        %v554 = vmax.f32 %v527, %v541
        %v555 = vmax.f32 %v528, %v542
        %s556 = scalar_lea.vmem %s462, 312 [#allocation3]
        %v557 = vld [vmem:[%s556] sm:$0xff]
        %v558 = vld [vmem:[%s556 + $0x8] sm:$0xff]
        %v559 = vld [vmem:[%s556 + $0x10] sm:$0xff]
        %v560 = vld [vmem:[%s556 + $0x18] sm:$0xff]
        %v561 = vld [vmem:[%s556 + $0x20] sm:$0xff]
        %v562 = vld [vmem:[%s556 + $0x28] sm:$0xff]
        %v563 = vld [vmem:[%s556 + $0x30] sm:$0xff]
        %v564 = vld [vmem:[%s556 + $0x38] sm:$0xff]
        %v565 = vld [vmem:[%s556 + $0x40] sm:$0xff]
        %v566 = vld [vmem:[%s556 + $0x48] sm:$0xff]
        %v567 = vld [vmem:[%s556 + $0x50] sm:$0xff]
        %v568 = vld [vmem:[%s556 + $0x58] sm:$0xff]
        %v569 = vld [vmem:[%s556 + $0x60] sm:$0xff]
        %v570 = vmax.f32 %v543, %v557
        %v571 = vmax.f32 %v544, %v558
        %v572 = vmax.f32 %v545, %v559
        %v573 = vmax.f32 %v546, %v560
        %v574 = vmax.f32 %v547, %v561
        %v575 = vmax.f32 %v548, %v562
        %v576 = vmax.f32 %v549, %v563
        %v577 = vmax.f32 %v550, %v564
        %v578 = vmax.f32 %v551, %v565
        %v579 = vmax.f32 %v552, %v566
        %v580 = vmax.f32 %v553, %v567
        %v581 = vmax.f32 %v554, %v568
        %v582 = vmax.f32 %v555, %v569
        %vm594 = vcmask 1046528
        %v595 = vrot.slane %v570, 1
        %v596 = vrot.slane %v571, 1
        %v597 = vsel %vm594, %v595, %v596
        %v598 = vrot.slane %v572, 1
        %v599 = vsel %vm594, %v596, %v598
        %v600 = vrot.slane %v573, 1
        %v601 = vsel %vm594, %v598, %v600
        %v602 = vrot.slane %v574, 1
        %v603 = vsel %vm594, %v600, %v602
        %v604 = vrot.slane %v575, 1
        %v605 = vsel %vm594, %v602, %v604
        %v606 = vrot.slane %v576, 1
        %v607 = vsel %vm594, %v604, %v606
        %v608 = vrot.slane %v577, 1
        %v609 = vsel %vm594, %v606, %v608
        %v610 = vrot.slane %v578, 1
        %v611 = vsel %vm594, %v608, %v610
        %v612 = vrot.slane %v579, 1
        %v613 = vsel %vm594, %v610, %v612
        %v614 = vrot.slane %v580, 1
        %v615 = vsel %vm594, %v612, %v614
        %616 = vrot.lane.b32.xlu0 %v597, 4
        %v617 = vpop.permute.xlu0 %616
        %618 = vrot.lane.b32.xlu0 %v599, 4
        %v619 = vpop.permute.xlu0 %618
        %620 = vrot.lane.b32.xlu0 %v601, 4
        %v621 = vpop.permute.xlu0 %620
        %622 = vrot.lane.b32.xlu0 %v603, 4
        %v623 = vpop.permute.xlu0 %622
        %624 = vrot.lane.b32.xlu0 %v605, 4
        %v625 = vpop.permute.xlu0 %624
        %626 = vrot.lane.b32.xlu0 %v607, 4
        %v627 = vpop.permute.xlu0 %626
        %628 = vrot.lane.b32.xlu0 %v609, 4
        %v629 = vpop.permute.xlu0 %628
        %630 = vrot.lane.b32.xlu0 %v611, 4
        %v631 = vpop.permute.xlu0 %630
        %632 = vrot.lane.b32.xlu0 %v613, 4
        %v633 = vpop.permute.xlu0 %632
        %634 = vrot.lane.b32.xlu0 %v615, 4
        %v635 = vpop.permute.xlu0 %634
        %vm646 = vcmask 1045504
        %v647 = vrot.slane %v570, 2
        %v648 = vrot.slane %v571, 2
        %v649 = vsel %vm646, %v647, %v648
        %v650 = vrot.slane %v572, 2
        %v651 = vsel %vm646, %v648, %v650
        %v652 = vrot.slane %v573, 2
        %v653 = vsel %vm646, %v650, %v652
        %v654 = vrot.slane %v574, 2
        %v655 = vsel %vm646, %v652, %v654
        %v656 = vrot.slane %v575, 2
        %v657 = vsel %vm646, %v654, %v656
        %v658 = vrot.slane %v576, 2
        %v659 = vsel %vm646, %v656, %v658
        %v660 = vrot.slane %v577, 2
        %v661 = vsel %vm646, %v658, %v660
        %v662 = vrot.slane %v578, 2
        %v663 = vsel %vm646, %v660, %v662
        %v664 = vrot.slane %v579, 2
        %v665 = vsel %vm646, %v662, %v664
        %v666 = vrot.slane %v580, 2
        %v667 = vsel %vm646, %v664, %v666
        %668 = vrot.lane.b32.xlu0 %v649, 8
        %v669 = vpop.permute.xlu0 %668
        %670 = vrot.lane.b32.xlu0 %v651, 8
        %v671 = vpop.permute.xlu0 %670
        %672 = vrot.lane.b32.xlu0 %v653, 8
        %v673 = vpop.permute.xlu0 %672
        %674 = vrot.lane.b32.xlu0 %v655, 8
        %v675 = vpop.permute.xlu0 %674
        %676 = vrot.lane.b32.xlu0 %v657, 8
        %v677 = vpop.permute.xlu0 %676
        %678 = vrot.lane.b32.xlu0 %v659, 8
        %v679 = vpop.permute.xlu0 %678
        %680 = vrot.lane.b32.xlu0 %v661, 8
        %v681 = vpop.permute.xlu0 %680
        %682 = vrot.lane.b32.xlu0 %v663, 8
        %v683 = vpop.permute.xlu0 %682
        %684 = vrot.lane.b32.xlu0 %v665, 8
        %v685 = vpop.permute.xlu0 %684
        %686 = vrot.lane.b32.xlu0 %v667, 8
        %v687 = vpop.permute.xlu0 %686
        %vm698 = vcmask 31744
        %v699 = vsel %vm698, %v570, %v617
        %v700 = vsel %vm698, %v571, %v619
        %v701 = vsel %vm698, %v572, %v621
        %v702 = vsel %vm698, %v573, %v623
        %v703 = vsel %vm698, %v574, %v625
        %v704 = vsel %vm698, %v575, %v627
        %v705 = vsel %vm698, %v576, %v629
        %v706 = vsel %vm698, %v577, %v631
        %v707 = vsel %vm698, %v578, %v633
        %v708 = vsel %vm698, %v579, %v635
        %vm709 = vcmask 64512
        %v710 = vsel %vm709, %v699, %v669
        %v711 = vsel %vm709, %v700, %v671
        %v712 = vsel %vm709, %v701, %v673
        %v713 = vsel %vm709, %v702, %v675
        %v714 = vsel %vm709, %v703, %v677
        %v715 = vsel %vm709, %v704, %v679
        %v716 = vsel %vm709, %v705, %v681
        %v717 = vsel %vm709, %v706, %v683
        %v718 = vsel %vm709, %v707, %v685
        %v719 = vsel %vm709, %v708, %v687
        %v720 = vld [vmem:[%s1] sm:$0xff]
        %v721 = vld [vmem:[%s1 + $0x8] sm:$0xf]
        %v723 = vrot.slane %v581, 1
        %v724 = vsel %vm594, %v614, %v723
        %725 = vrot.lane.b32.xlu0 %v724, 4
        %v726 = vpop.permute.xlu0 %725
        %727 = vrot.lane.b32.xlu0 %v723, 4
        %v728 = vpop.permute.xlu0 %727
        %v731 = vrot.slane %v581, 2
        %v732 = vsel %vm646, %v666, %v731
        %733 = vrot.lane.b32.xlu0 %v732, 8
        %v734 = vpop.permute.xlu0 %733
        %735 = vrot.lane.b32.xlu0 %v731, 8
        %v736 = vpop.permute.xlu0 %735
        %v739 = vsel %vm698, %v580, %v726
        %v740 = vsel %vm698, %v581, %v728
        %v741 = vsel %vm709, %v739, %v734
        %v742 = vsel %vm709, %v740, %v736
        %s743 = scalar_lea.vmem %s1, 16
        %v744 = vld [vmem:[%s743] sm:$0xff]
        %v745 = vld [vmem:[%s743 + $0x8] sm:$0xf]
        %v757 = vrot.slane %v711, 2
        %v758 = vrot.slane %v712, 2
        %v759 = vsel %vm646, %v757, %v758
        %v760 = vrot.slane %v713, 2
        %v761 = vsel %vm646, %v758, %v760
        %v762 = vrot.slane %v714, 2
        %v763 = vsel %vm646, %v760, %v762
        %v764 = vrot.slane %v715, 2
        %v765 = vsel %vm646, %v762, %v764
        %v766 = vrot.slane %v716, 2
        %v767 = vsel %vm646, %v764, %v766
        %v768 = vrot.slane %v717, 2
        %v769 = vsel %vm646, %v766, %v768
        %v770 = vrot.slane %v718, 2
        %v771 = vsel %vm646, %v768, %v770
        %v772 = vrot.slane %v719, 2
        %v773 = vsel %vm646, %v770, %v772
        %v774 = vrot.slane %v741, 2
        %v775 = vsel %vm646, %v772, %v774
        %v776 = vrot.slane %v742, 2
        %v777 = vsel %vm646, %v774, %v776
        %vm778 = vcmask 97280
        %v779 = vsel %vm778, %v759, 0
        %v781 = vsel %vm778, %v761, 0
        %v783 = vsel %vm778, %v763, 0
        %v785 = vsel %vm778, %v765, 0
        %v787 = vsel %vm778, %v767, 0
        %v789 = vsel %vm778, %v769, 0
        %v791 = vsel %vm778, %v771, 0
        %v793 = vsel %vm778, %v773, 0
        %v795 = vsel %vm778, %v775, 0
        %v797 = vsel %vm778, %v777, 0
        %vm799 = vcmask 1043456
        %v801 = vsel %vm799, %v745, 0
        %803 = vmatprep.subr.mxu0 0.0
        %804 = vmatpush1.msra.mxu0 %v744
        %805 = vmatprep.subr.mxu0 0.0
        %806 = vmatpush1.msra.mxu0 %v801
        %807 = vmatprep.subr.mxu0 0.0
        %808 = vmatpush1.msra.mxu0 0.0
        %809 = vmatprep.subr.mxu0 0.0
        %810 = vmatpush1.msra.mxu0 0.0
        %811 = vmatprep.subr.mxu0 0.0
        %812 = vmatpush1.msra.mxu0 0.0
        %813 = vmatprep.subr.mxu0 0.0
        %814 = vmatpush1.msra.mxu0 0.0
        %815 = vmatprep.subr.mxu0 0.0
        %816 = vmatpush1.msra.mxu0 0.0
        %817 = vmatprep.subr.mxu0 0.0
        %818 = vmatpush1.msra.mxu0 0.0
        %819 = vmatprep.subr.mxu0 0.0
        %820 = vmatpush1.msra.mxu0 0.0
        %821 = vmatprep.subr.mxu0 0.0
        %822 = vmatpush1.msra.mxu0 0.0
        %823 = vmatprep.subr.mxu0 0.0
        %824 = vmatpush1.msra.mxu0 0.0
        %825 = vmatprep.subr.mxu0 0.0
        %826 = vmatpush1.msra.mxu0 0.0
        %827 = vmatprep.subr.mxu0 0.0
        %828 = vmatpush1.msra.mxu0 0.0
        %829 = vmatprep.subr.mxu0 0.0
        %830 = vmatpush1.msra.mxu0 0.0
        %831 = vmatprep.subr.mxu0 0.0
        %832 = vmatpush1.msra.mxu0 0.0
        %833 = vmatprep.subr.mxu0 0.0
        %834 = vmatpush1.msra.mxu0 0.0
        %835 = vmatprep.subr.mxu0 0.0
        %836 = vmatpush1.msra.mxu0 0.0
        %837 = vmatprep.subr.mxu0 0.0
        %838 = vmatpush1.msra.mxu0 0.0
        %839 = vmatprep.subr.mxu0 0.0
        %840 = vmatpush1.msra.mxu0 0.0
        %841 = vmatprep.subr.mxu0 0.0
        %842 = vmatpush1.msra.mxu0 0.0
        %843 = vmatprep.subr.mxu0 0.0
        %844 = vmatpush1.msra.mxu0 0.0
        %845 = vmatprep.subr.mxu0 0.0
        %846 = vmatpush1.msra.mxu0 0.0
        %847 = vmatprep.subr.mxu0 0.0
        %848 = vmatpush1.msra.mxu0 0.0
        %849 = vmatprep.subr.mxu0 0.0
        %850 = vmatpush1.msra.mxu0 0.0
        %851 = vmatprep.subr.mxu0 0.0
        %852 = vmatpush1.msra.mxu0 0.0
        %853 = vmatprep.subr.mxu0 0.0
        %854 = vmatpush1.msra.mxu0 0.0
        %855 = vmatprep.subr.mxu0 0.0
        %856 = vmatpush1.msra.mxu0 0.0
        %857 = vmatprep.subr.mxu0 0.0
        %858 = vmatpush1.msra.mxu0 0.0
        %859 = vmatprep.subr.mxu0 0.0
        %860 = vmatpush1.msra.mxu0 0.0
        %861 = vmatprep.subr.mxu0 0.0
        %862 = vmatpush1.msra.mxu0 0.0
        %863 = vmatprep.subr.mxu0 0.0
        %864 = vmatpush1.msra.mxu0 0.0
        %865 = vmatprep.subr.mxu0 0.0
        %866 = vmatpush1.msra.mxu0 0.0
        %867 = vmatprep.mubr.f32.mxu0 0.0
        %868 = vmatmul.mubr.f32.gmra.mrb[0].mxu0 %v779
        %v869 = vpop.f32.mrb[0].mxu0
        %v870 = vadd.f32 0.0, %v869
        %v871 = vpop.f32.mrb[0].mxu0
        %872 = vmatprep.mubr.f32.mxu0 0.0
        %873 = vmatmul.mubr.f32.gmra.mrb[0].mxu0 %v781
        %v874 = vpop.f32.mrb[0].mxu0
        %v875 = vadd.f32 0.0, %v874
        %v876 = vpop.f32.mrb[0].mxu0
        %877 = vmatprep.mubr.f32.mxu0 0.0
        %878 = vmatmul.mubr.f32.gmra.mrb[0].mxu0 %v783
        %v879 = vpop.f32.mrb[0].mxu0
        %v880 = vadd.f32 0.0, %v879
        %v881 = vpop.f32.mrb[0].mxu0
        %882 = vmatprep.mubr.f32.mxu0 0.0
        %883 = vmatmul.mubr.f32.gmra.mrb[0].mxu0 %v785
        %v884 = vpop.f32.mrb[0].mxu0
        %v885 = vadd.f32 0.0, %v884
        %v886 = vpop.f32.mrb[0].mxu0
        %887 = vmatprep.mubr.f32.mxu0 0.0
        %888 = vmatmul.mubr.f32.gmra.mrb[0].mxu0 %v787
        %v889 = vpop.f32.mrb[0].mxu0
        %v890 = vadd.f32 0.0, %v889
        %v891 = vpop.f32.mrb[0].mxu0
        %892 = vmatprep.mubr.f32.mxu0 0.0
        %893 = vmatmul.mubr.f32.gmra.mrb[0].mxu0 %v789
        %v894 = vpop.f32.mrb[0].mxu0
        %v895 = vadd.f32 0.0, %v894
        %v896 = vpop.f32.mrb[0].mxu0
        %897 = vmatprep.mubr.f32.mxu0 0.0
        %898 = vmatmul.mubr.f32.gmra.mrb[0].mxu0 %v791
        %v899 = vpop.f32.mrb[0].mxu0
        %v900 = vadd.f32 0.0, %v899
        %v901 = vpop.f32.mrb[0].mxu0
        %902 = vmatprep.mubr.f32.mxu0 0.0
        %903 = vmatmul.mubr.f32.gmra.mrb[0].mxu0 %v793
        %v904 = vpop.f32.mrb[0].mxu0
        %v905 = vadd.f32 0.0, %v904
        %v906 = vpop.f32.mrb[0].mxu0
        %907 = vmatprep.mubr.f32.mxu0 0.0
        %908 = vmatmul.mubr.f32.gmra.mrb[0].mxu0 %v795
        %v909 = vpop.f32.mrb[0].mxu0
        %v910 = vadd.f32 0.0, %v909
        %v911 = vpop.f32.mrb[0].mxu0
        %912 = vmatprep.mubr.f32.mxu0 0.0
        %913 = vmatmul.mubr.f32.gmra.mrb[0].mxu0 %v797
        %v914 = vpop.f32.mrb[0].mxu0
        %v915 = vadd.f32 0.0, %v914
        %v916 = vpop.f32.mrb[0].mxu0
        %917 = vdwg.mxu0
        %v919 = vsel %vm778, %v710, 0
        %v921 = vsel %vm778, %v711, 0
        %v923 = vsel %vm778, %v712, 0
        %v925 = vsel %vm778, %v713, 0
        %v927 = vsel %vm778, %v714, 0
        %v929 = vsel %vm778, %v715, 0
        %v931 = vsel %vm778, %v716, 0
        %v933 = vsel %vm778, %v717, 0
        %v935 = vsel %vm778, %v718, 0
        %v937 = vsel %vm778, %v719, 0
        %v940 = vsel %vm799, %v721, 0
        %942 = vmatprep.subr.mxu0 0.0
        %943 = vmatpush1.msra.mxu0 %v720
        %944 = vmatprep.subr.mxu0 0.0
        %945 = vmatpush1.msra.mxu0 %v940
        %946 = vmatprep.subr.mxu0 0.0
        %947 = vmatpush1.msra.mxu0 0.0
        %948 = vmatprep.subr.mxu0 0.0
        %949 = vmatpush1.msra.mxu0 0.0
        %950 = vmatprep.subr.mxu0 0.0
        %951 = vmatpush1.msra.mxu0 0.0
        %952 = vmatprep.subr.mxu0 0.0
        %953 = vmatpush1.msra.mxu0 0.0
        %954 = vmatprep.subr.mxu0 0.0
        %955 = vmatpush1.msra.mxu0 0.0
        %956 = vmatprep.subr.mxu0 0.0
        %957 = vmatpush1.msra.mxu0 0.0
        %958 = vmatprep.subr.mxu0 0.0
        %959 = vmatpush1.msra.mxu0 0.0
        %960 = vmatprep.subr.mxu0 0.0
        %961 = vmatpush1.msra.mxu0 0.0
        %962 = vmatprep.subr.mxu0 0.0
        %963 = vmatpush1.msra.mxu0 0.0
        %964 = vmatprep.subr.mxu0 0.0
        %965 = vmatpush1.msra.mxu0 0.0
        %966 = vmatprep.subr.mxu0 0.0
        %967 = vmatpush1.msra.mxu0 0.0
        %968 = vmatprep.subr.mxu0 0.0
        %969 = vmatpush1.msra.mxu0 0.0
        %970 = vmatprep.subr.mxu0 0.0
        %971 = vmatpush1.msra.mxu0 0.0
        %972 = vmatprep.subr.mxu0 0.0
        %973 = vmatpush1.msra.mxu0 0.0
        %974 = vmatprep.subr.mxu0 0.0
        %975 = vmatpush1.msra.mxu0 0.0
        %976 = vmatprep.subr.mxu0 0.0
        %977 = vmatpush1.msra.mxu0 0.0
        %978 = vmatprep.subr.mxu0 0.0
        %979 = vmatpush1.msra.mxu0 0.0
        %980 = vmatprep.subr.mxu0 0.0
        %981 = vmatpush1.msra.mxu0 0.0
        %982 = vmatprep.subr.mxu0 0.0
        %983 = vmatpush1.msra.mxu0 0.0
        %984 = vmatprep.subr.mxu0 0.0
        %985 = vmatpush1.msra.mxu0 0.0
        %986 = vmatprep.subr.mxu0 0.0
        %987 = vmatpush1.msra.mxu0 0.0
        %988 = vmatprep.subr.mxu0 0.0
        %989 = vmatpush1.msra.mxu0 0.0
        %990 = vmatprep.subr.mxu0 0.0
        %991 = vmatpush1.msra.mxu0 0.0
        %992 = vmatprep.subr.mxu0 0.0
        %993 = vmatpush1.msra.mxu0 0.0
        %994 = vmatprep.subr.mxu0 0.0
        %995 = vmatpush1.msra.mxu0 0.0
        %996 = vmatprep.subr.mxu0 0.0
        %997 = vmatpush1.msra.mxu0 0.0
        %998 = vmatprep.subr.mxu0 0.0
        %999 = vmatpush1.msra.mxu0 0.0
        %1000 = vmatprep.subr.mxu0 0.0
        %1001 = vmatpush1.msra.mxu0 0.0
        %1002 = vmatprep.subr.mxu0 0.0
        %1003 = vmatpush1.msra.mxu0 0.0
        %1004 = vmatprep.subr.mxu0 0.0
        %1005 = vmatpush1.msra.mxu0 0.0
        %1006 = vmatprep.mubr.f32.mxu0 0.0
        %1007 = vmatmul.mubr.f32.gmra.mrb[0].mxu0 %v919
        %v1008 = vpop.f32.mrb[0].mxu0
        %v1009 = vadd.f32 %v870, %v1008
        %v1010 = vpop.f32.mrb[0].mxu0
        %1011 = vmatprep.mubr.f32.mxu0 0.0
        %1012 = vmatmul.mubr.f32.gmra.mrb[0].mxu0 %v921
        %v1013 = vpop.f32.mrb[0].mxu0
        %v1014 = vadd.f32 %v875, %v1013
        %v1015 = vpop.f32.mrb[0].mxu0
        %1016 = vmatprep.mubr.f32.mxu0 0.0
        %1017 = vmatmul.mubr.f32.gmra.mrb[0].mxu0 %v923
        %v1018 = vpop.f32.mrb[0].mxu0
        %v1019 = vadd.f32 %v880, %v1018
        %v1020 = vpop.f32.mrb[0].mxu0
        %1021 = vmatprep.mubr.f32.mxu0 0.0
        %1022 = vmatmul.mubr.f32.gmra.mrb[0].mxu0 %v925
        %v1023 = vpop.f32.mrb[0].mxu0
        %v1024 = vadd.f32 %v885, %v1023
        %v1025 = vpop.f32.mrb[0].mxu0
        %1026 = vmatprep.mubr.f32.mxu0 0.0
        %1027 = vmatmul.mubr.f32.gmra.mrb[0].mxu0 %v927
        %v1028 = vpop.f32.mrb[0].mxu0
        %v1029 = vadd.f32 %v890, %v1028
        %v1030 = vpop.f32.mrb[0].mxu0
        %1031 = vmatprep.mubr.f32.mxu0 0.0
        %1032 = vmatmul.mubr.f32.gmra.mrb[0].mxu0 %v929
        %v1033 = vpop.f32.mrb[0].mxu0
        %v1034 = vadd.f32 %v895, %v1033
        %v1035 = vpop.f32.mrb[0].mxu0
        %1036 = vmatprep.mubr.f32.mxu0 0.0
        %1037 = vmatmul.mubr.f32.gmra.mrb[0].mxu0 %v931
        %v1038 = vpop.f32.mrb[0].mxu0
        %v1039 = vadd.f32 %v900, %v1038
        %v1040 = vpop.f32.mrb[0].mxu0
        %1041 = vmatprep.mubr.f32.mxu0 0.0
        %1042 = vmatmul.mubr.f32.gmra.mrb[0].mxu0 %v933
        %v1043 = vpop.f32.mrb[0].mxu0
        %v1044 = vadd.f32 %v905, %v1043
        %v1045 = vpop.f32.mrb[0].mxu0
        %1046 = vmatprep.mubr.f32.mxu0 0.0
        %1047 = vmatmul.mubr.f32.gmra.mrb[0].mxu0 %v935
        %v1048 = vpop.f32.mrb[0].mxu0
        %v1049 = vadd.f32 %v910, %v1048
        %v1050 = vpop.f32.mrb[0].mxu0
        %1051 = vmatprep.mubr.f32.mxu0 0.0
        %1052 = vmatmul.mubr.f32.gmra.mrb[0].mxu0 %v937
        %v1053 = vpop.f32.mrb[0].mxu0
        %v1054 = vadd.f32 %v915, %v1053
        %v1055 = vpop.f32.mrb[0].mxu0
        %1056 = vdwg.mxu0
        %v1058 = vrot.slane %v582, 1
        %v1059 = vsel %vm594, %v723, %v1058
        %1060 = vrot.lane.b32.xlu0 %v1059, 4
        %v1061 = vpop.permute.xlu0 %1060
        %1062 = vrot.lane.b32.xlu0 %v1058, 4
        %v1063 = vpop.permute.xlu0 %1062
        %v1066 = vrot.slane %v582, 2
        %v1067 = vsel %vm646, %v731, %v1066
        %1068 = vrot.lane.b32.xlu0 %v1067, 8
        %v1069 = vpop.permute.xlu0 %1068
        %1070 = vrot.lane.b32.xlu0 %v1066, 8
        %v1071 = vpop.permute.xlu0 %1070
        %v1074 = vsel %vm698, %v581, %v1061
        %v1075 = vsel %vm698, %v582, %v1063
        %v1076 = vsel %vm709, %v1074, %v1069
        %v1077 = vsel %vm709, %v1075, %v1071
        %s1078 = scalar_lea.vmem %s1, 32
        %v1079 = vld [vmem:[%s1078] sm:$0xff]
        %v1080 = vld [vmem:[%s1078 + $0x8] sm:$0xf]
        %v1083 = vrot.slane %v712, 4
        %v1084 = vrot.slane %v713, 4
        %v1085 = vsel %vm799, %v1083, %v1084
        %v1086 = vrot.slane %v714, 4
        %v1087 = vsel %vm799, %v1084, %v1086
        %v1088 = vrot.slane %v715, 4
        %v1089 = vsel %vm799, %v1086, %v1088
        %v1090 = vrot.slane %v716, 4
        %v1091 = vsel %vm799, %v1088, %v1090
        %v1092 = vrot.slane %v717, 4
        %v1093 = vsel %vm799, %v1090, %v1092
        %v1094 = vrot.slane %v718, 4
        %v1095 = vsel %vm799, %v1092, %v1094
        %v1096 = vrot.slane %v719, 4
        %v1097 = vsel %vm799, %v1094, %v1096
        %v1098 = vrot.slane %v741, 4
        %v1099 = vsel %vm799, %v1096, %v1098
        %v1100 = vrot.slane %v1076, 4
        %v1101 = vsel %vm799, %v1098, %v1100
        %v1102 = vrot.slane %v1077, 4
        %v1103 = vsel %vm799, %v1100, %v1102
        %v1104 = vsel %vm778, %v1085, 0
        %v1106 = vsel %vm778, %v1087, 0
        %v1108 = vsel %vm778, %v1089, 0
        %v1110 = vsel %vm778, %v1091, 0
        %v1112 = vsel %vm778, %v1093, 0
        %v1114 = vsel %vm778, %v1095, 0
        %v1116 = vsel %vm778, %v1097, 0
        %v1118 = vsel %vm778, %v1099, 0
        %v1120 = vsel %vm778, %v1101, 0
        %v1122 = vsel %vm778, %v1103, 0
        %v1125 = vsel %vm799, %v1080, 0
        %1127 = vmatprep.subr.mxu0 0.0
        %1128 = vmatpush1.msra.mxu0 %v1079
        %1129 = vmatprep.subr.mxu0 0.0
        %1130 = vmatpush1.msra.mxu0 %v1125
        %1131 = vmatprep.subr.mxu0 0.0
        %1132 = vmatpush1.msra.mxu0 0.0
        %1133 = vmatprep.subr.mxu0 0.0
        %1134 = vmatpush1.msra.mxu0 0.0
        %1135 = vmatprep.subr.mxu0 0.0
        %1136 = vmatpush1.msra.mxu0 0.0
        %1137 = vmatprep.subr.mxu0 0.0
        %1138 = vmatpush1.msra.mxu0 0.0
        %1139 = vmatprep.subr.mxu0 0.0
        %1140 = vmatpush1.msra.mxu0 0.0
        %1141 = vmatprep.subr.mxu0 0.0
        %1142 = vmatpush1.msra.mxu0 0.0
        %1143 = vmatprep.subr.mxu0 0.0
        %1144 = vmatpush1.msra.mxu0 0.0
        %1145 = vmatprep.subr.mxu0 0.0
        %1146 = vmatpush1.msra.mxu0 0.0
        %1147 = vmatprep.subr.mxu0 0.0
        %1148 = vmatpush1.msra.mxu0 0.0
        %1149 = vmatprep.subr.mxu0 0.0
        %1150 = vmatpush1.msra.mxu0 0.0
        %1151 = vmatprep.subr.mxu0 0.0
        %1152 = vmatpush1.msra.mxu0 0.0
        %1153 = vmatprep.subr.mxu0 0.0
        %1154 = vmatpush1.msra.mxu0 0.0
        %1155 = vmatprep.subr.mxu0 0.0
        %1156 = vmatpush1.msra.mxu0 0.0
        %1157 = vmatprep.subr.mxu0 0.0
        %1158 = vmatpush1.msra.mxu0 0.0
        %1159 = vmatprep.subr.mxu0 0.0
        %1160 = vmatpush1.msra.mxu0 0.0
        %1161 = vmatprep.subr.mxu0 0.0
        %1162 = vmatpush1.msra.mxu0 0.0
        %1163 = vmatprep.subr.mxu0 0.0
        %1164 = vmatpush1.msra.mxu0 0.0
        %1165 = vmatprep.subr.mxu0 0.0
        %1166 = vmatpush1.msra.mxu0 0.0
        %1167 = vmatprep.subr.mxu0 0.0
        %1168 = vmatpush1.msra.mxu0 0.0
        %1169 = vmatprep.subr.mxu0 0.0
        %1170 = vmatpush1.msra.mxu0 0.0
        %1171 = vmatprep.subr.mxu0 0.0
        %1172 = vmatpush1.msra.mxu0 0.0
        %1173 = vmatprep.subr.mxu0 0.0
        %1174 = vmatpush1.msra.mxu0 0.0
        %1175 = vmatprep.subr.mxu0 0.0
        %1176 = vmatpush1.msra.mxu0 0.0
        %1177 = vmatprep.subr.mxu0 0.0
        %1178 = vmatpush1.msra.mxu0 0.0
        %1179 = vmatprep.subr.mxu0 0.0
        %1180 = vmatpush1.msra.mxu0 0.0
        %1181 = vmatprep.subr.mxu0 0.0
        %1182 = vmatpush1.msra.mxu0 0.0
        %1183 = vmatprep.subr.mxu0 0.0
        %1184 = vmatpush1.msra.mxu0 0.0
        %1185 = vmatprep.subr.mxu0 0.0
        %1186 = vmatpush1.msra.mxu0 0.0
        %1187 = vmatprep.subr.mxu0 0.0
        %1188 = vmatpush1.msra.mxu0 0.0
        %1189 = vmatprep.subr.mxu0 0.0
        %1190 = vmatpush1.msra.mxu0 0.0
        %1191 = vmatprep.mubr.f32.mxu0 0.0
        %1192 = vmatmul.mubr.f32.gmra.mrb[0].mxu0 %v1104
        %v1193 = vpop.f32.mrb[0].mxu0
        %v1194 = vadd.f32 0.0, %v1193
        %v1195 = vpop.f32.mrb[0].mxu0
        %1196 = vmatprep.mubr.f32.mxu0 0.0
        %1197 = vmatmul.mubr.f32.gmra.mrb[0].mxu0 %v1106
        %v1198 = vpop.f32.mrb[0].mxu0
        %v1199 = vadd.f32 0.0, %v1198
        %v1200 = vpop.f32.mrb[0].mxu0
        %1201 = vmatprep.mubr.f32.mxu0 0.0
        %1202 = vmatmul.mubr.f32.gmra.mrb[0].mxu0 %v1108
        %v1203 = vpop.f32.mrb[0].mxu0
        %v1204 = vadd.f32 0.0, %v1203
        %v1205 = vpop.f32.mrb[0].mxu0
        %1206 = vmatprep.mubr.f32.mxu0 0.0
        %1207 = vmatmul.mubr.f32.gmra.mrb[0].mxu0 %v1110
        %v1208 = vpop.f32.mrb[0].mxu0
        %v1209 = vadd.f32 0.0, %v1208
        %v1210 = vpop.f32.mrb[0].mxu0
        %1211 = vmatprep.mubr.f32.mxu0 0.0
        %1212 = vmatmul.mubr.f32.gmra.mrb[0].mxu0 %v1112
        %v1213 = vpop.f32.mrb[0].mxu0
        %v1214 = vadd.f32 0.0, %v1213
        %v1215 = vpop.f32.mrb[0].mxu0
        %1216 = vmatprep.mubr.f32.mxu0 0.0
        %1217 = vmatmul.mubr.f32.gmra.mrb[0].mxu0 %v1114
        %v1218 = vpop.f32.mrb[0].mxu0
        %v1219 = vadd.f32 0.0, %v1218
        %v1220 = vpop.f32.mrb[0].mxu0
        %1221 = vmatprep.mubr.f32.mxu0 0.0
        %1222 = vmatmul.mubr.f32.gmra.mrb[0].mxu0 %v1116
        %v1223 = vpop.f32.mrb[0].mxu0
        %v1224 = vadd.f32 0.0, %v1223
        %v1225 = vpop.f32.mrb[0].mxu0
        %1226 = vmatprep.mubr.f32.mxu0 0.0
        %1227 = vmatmul.mubr.f32.gmra.mrb[0].mxu0 %v1118
        %v1228 = vpop.f32.mrb[0].mxu0
        %v1229 = vadd.f32 0.0, %v1228
        %v1230 = vpop.f32.mrb[0].mxu0
        %1231 = vmatprep.mubr.f32.mxu0 0.0
        %1232 = vmatmul.mubr.f32.gmra.mrb[0].mxu0 %v1120
        %v1233 = vpop.f32.mrb[0].mxu0
        %v1234 = vadd.f32 0.0, %v1233
        %v1235 = vpop.f32.mrb[0].mxu0
        %1236 = vmatprep.mubr.f32.mxu0 0.0
        %1237 = vmatmul.mubr.f32.gmra.mrb[0].mxu0 %v1122
        %v1238 = vpop.f32.mrb[0].mxu0
        %v1239 = vadd.f32 0.0, %v1238
        %v1240 = vpop.f32.mrb[0].mxu0
        %1241 = vdwg.mxu0
        %v1242 = vadd.f32 %v1009, %v1194
        %v1243 = vadd.f32 %v1014, %v1199
        %v1244 = vadd.f32 %v1019, %v1204
        %v1245 = vadd.f32 %v1024, %v1209
        %v1246 = vadd.f32 %v1029, %v1214
        %v1247 = vadd.f32 %v1034, %v1219
        %v1248 = vadd.f32 %v1039, %v1224
        %v1249 = vadd.f32 %v1044, %v1229
        %v1250 = vadd.f32 %v1049, %v1234
        %v1251 = vadd.f32 %v1054, %v1239
        %v1252 = vld [vmem:[%s2] sm:$0x1]
        %v1254 = vlaneseq
        %v1255 = vshrl.u32 %v1254, 7
        %v1256 = vsub.s32 0, %v1255
        %v1257 = vrot.slane %v1252, %v1256
        %v1259 = vadd.f32 %v1242, %v1257
        %v1260 = vadd.f32 %v1243, %v1257
        %v1261 = vadd.f32 %v1244, %v1257
        %v1262 = vadd.f32 %v1245, %v1257
        %v1263 = vadd.f32 %v1246, %v1257
        %v1264 = vadd.f32 %v1247, %v1257
        %v1265 = vadd.f32 %v1248, %v1257
        %v1266 = vadd.f32 %v1249, %v1257
        %v1267 = vadd.f32 %v1250, %v1257
        %v1268 = vadd.f32 %v1251, %v1257
        %v1269 = vmax.f32 %v1259, 0.0
        %v1270 = vmax.f32 %v1260, 0.0
        %v1271 = vmax.f32 %v1261, 0.0
        %v1272 = vmax.f32 %v1262, 0.0
        %v1273 = vmax.f32 %v1263, 0.0
        %v1274 = vmax.f32 %v1264, 0.0
        %v1275 = vmax.f32 %v1265, 0.0
        %v1276 = vmax.f32 %v1266, 0.0
        %v1277 = vmax.f32 %v1267, 0.0
        %v1278 = vmax.f32 %v1268, 0.0
        %1279 = vst.msk [vmem:[#allocation2] sm:$0xff] %vm709, %v1269
        %1280 = vst.msk [vmem:[#allocation2 + $0x8] sm:$0xff] %vm709, %v1270
        %1281 = vst.msk [vmem:[#allocation2 + $0x10] sm:$0xff] %vm709, %v1271
        %1282 = vst.msk [vmem:[#allocation2 + $0x18] sm:$0xff] %vm709, %v1272
        %1283 = vst.msk [vmem:[#allocation2 + $0x20] sm:$0xff] %vm709, %v1273
        %1284 = vst.msk [vmem:[#allocation2 + $0x28] sm:$0xff] %vm709, %v1274
        %1285 = vst.msk [vmem:[#allocation2 + $0x30] sm:$0xff] %vm709, %v1275
        %1286 = vst.msk [vmem:[#allocation2 + $0x38] sm:$0xff] %vm709, %v1276
        %1287 = vst.msk [vmem:[#allocation2 + $0x40] sm:$0xff] %vm709, %v1277
        %1288 = vst.msk [vmem:[#allocation2 + $0x48] sm:$0xff] %vm709, %v1278
        %v1289 = vld [vmem:[#allocation2] ss:$10 sm:$0xff]
        %s1290 = scalar_lea.vmem [#allocation2], 1
        %v1291 = vld [vmem:[%s1290] ss:$10 sm:$0xff]
        %s1292 = scalar_lea.vmem [#allocation2], 2
        %v1293 = vld [vmem:[%s1292] ss:$10 sm:$0xff]
        %s1294 = scalar_lea.vmem [#allocation2], 3
        %v1295 = vld [vmem:[%s1294] ss:$10 sm:$0xff]
        %s1296 = scalar_lea.vmem [#allocation2], 4
        %v1297 = vld [vmem:[%s1296] ss:$10 sm:$0xff]
        %s1298 = scalar_lea.vmem [#allocation2], 5
        %v1299 = vld [vmem:[%s1298] ss:$10 sm:$0xff]
        %s1300 = scalar_lea.vmem [#allocation2], 6
        %v1301 = vld [vmem:[%s1300] ss:$10 sm:$0xff]
        %s1302 = scalar_lea.vmem [#allocation2], 7
        %v1303 = vld [vmem:[%s1302] ss:$10 sm:$0xff]
        %1305 = vrot.lane.b32.xlu0 %v1291, 8
        %v1306 = vpop.permute.xlu0 %1305
        %1309 = vrot.lane.b32.xlu0 %v1293, 16
        %v1310 = vpop.permute.xlu0 %1309
        %1313 = vrot.lane.b32.xlu0 %v1295, 24
        %v1314 = vpop.permute.xlu0 %1313
        %1317 = vrot.lane.b32.xlu0 %v1297, 32
        %v1318 = vpop.permute.xlu0 %1317
        %1321 = vrot.lane.b32.xlu0 %v1299, 40
        %v1322 = vpop.permute.xlu0 %1321
        %1325 = vrot.lane.b32.xlu0 %v1301, 48
        %v1326 = vpop.permute.xlu0 %1325
        %1329 = vrot.lane.b32.xlu0 %v1303, 56
        %v1330 = vpop.permute.xlu0 %1329
        %v1332 = vsel %vm709, %v1289, %v1306
        %vm1333 = vcmask 130048
        %v1334 = vsel %vm1333, %v1332, %v1310
        %vm1335 = vcmask 195584
        %v1336 = vsel %vm1335, %v1334, %v1314
        %vm1337 = vcmask 261120
        %v1338 = vsel %vm1337, %v1336, %v1318
        %vm1339 = vcmask 326656
        %v1340 = vsel %vm1339, %v1338, %v1322
        %vm1341 = vcmask 392192
        %v1342 = vsel %vm1341, %v1340, %v1326
        %vm1343 = vcmask 457728
        %v1344 = vsel %vm1343, %v1342, %v1330
        %v1345 = vld [vmem:[%s3] sm:$0xff]
        %v1346 = vld [vmem:[%s3 + $0x8] sm:$0xff]
        %v1348 = vsel %vm709, %v1345, 0
        %v1351 = vsel %vm709, %v1346, 0
        %1353 = vmatprep.subr.mxu0 0.0
        %1354 = vmatpush1.msra.mxu0 %v1344
        %1355 = vmatprep.subr.mxu0 0.0
        %1356 = vmatpush1.msra.mxu0 0.0
        %1357 = vmatprep.subr.mxu0 0.0
        %1358 = vmatpush1.msra.mxu0 0.0
        %1359 = vmatprep.subr.mxu0 0.0
        %1360 = vmatpush1.msra.mxu0 0.0
        %1361 = vmatprep.subr.mxu0 0.0
        %1362 = vmatpush1.msra.mxu0 0.0
        %1363 = vmatprep.subr.mxu0 0.0
        %1364 = vmatpush1.msra.mxu0 0.0
        %1365 = vmatprep.subr.mxu0 0.0
        %1366 = vmatpush1.msra.mxu0 0.0
        %1367 = vmatprep.subr.mxu0 0.0
        %1368 = vmatpush1.msra.mxu0 0.0
        %1369 = vmatprep.subr.mxu0 0.0
        %1370 = vmatpush1.msra.mxu0 0.0
        %1371 = vmatprep.subr.mxu0 0.0
        %1372 = vmatpush1.msra.mxu0 0.0
        %1373 = vmatprep.subr.mxu0 0.0
        %1374 = vmatpush1.msra.mxu0 0.0
        %1375 = vmatprep.subr.mxu0 0.0
        %1376 = vmatpush1.msra.mxu0 0.0
        %1377 = vmatprep.subr.mxu0 0.0
        %1378 = vmatpush1.msra.mxu0 0.0
        %1379 = vmatprep.subr.mxu0 0.0
        %1380 = vmatpush1.msra.mxu0 0.0
        %1381 = vmatprep.subr.mxu0 0.0
        %1382 = vmatpush1.msra.mxu0 0.0
        %1383 = vmatprep.subr.mxu0 0.0
        %1384 = vmatpush1.msra.mxu0 0.0
        %1385 = vmatprep.subr.mxu0 0.0
        %1386 = vmatpush1.msra.mxu0 0.0
        %1387 = vmatprep.subr.mxu0 0.0
        %1388 = vmatpush1.msra.mxu0 0.0
        %1389 = vmatprep.subr.mxu0 0.0
        %1390 = vmatpush1.msra.mxu0 0.0
        %1391 = vmatprep.subr.mxu0 0.0
        %1392 = vmatpush1.msra.mxu0 0.0
        %1393 = vmatprep.subr.mxu0 0.0
        %1394 = vmatpush1.msra.mxu0 0.0
        %1395 = vmatprep.subr.mxu0 0.0
        %1396 = vmatpush1.msra.mxu0 0.0
        %1397 = vmatprep.subr.mxu0 0.0
        %1398 = vmatpush1.msra.mxu0 0.0
        %1399 = vmatprep.subr.mxu0 0.0
        %1400 = vmatpush1.msra.mxu0 0.0
        %1401 = vmatprep.subr.mxu0 0.0
        %1402 = vmatpush1.msra.mxu0 0.0
        %1403 = vmatprep.subr.mxu0 0.0
        %1404 = vmatpush1.msra.mxu0 0.0
        %1405 = vmatprep.subr.mxu0 0.0
        %1406 = vmatpush1.msra.mxu0 0.0
        %1407 = vmatprep.subr.mxu0 0.0
        %1408 = vmatpush1.msra.mxu0 0.0
        %1409 = vmatprep.subr.mxu0 0.0
        %1410 = vmatpush1.msra.mxu0 0.0
        %1411 = vmatprep.subr.mxu0 0.0
        %1412 = vmatpush1.msra.mxu0 0.0
        %1413 = vmatprep.subr.mxu0 0.0
        %1414 = vmatpush1.msra.mxu0 0.0
        %1415 = vmatprep.subr.mxu0 0.0
        %1416 = vmatpush1.msra.mxu0 0.0
        %1417 = vmatprep.mubr.f32.mxu0 0.0
        %1418 = vmatmul.mubr.f32.gmra.mrb[0].mxu0 %v1348
        %v1419 = vpop.f32.mrb[0].mxu0
        %v1420 = vadd.f32 0.0, %v1419
        %v1421 = vpop.f32.mrb[0].mxu0
        %1422 = vmatprep.mubr.f32.mxu0 0.0
        %1423 = vmatmul.mubr.f32.gmra.mrb[0].mxu0 %v1351
        %v1424 = vpop.f32.mrb[0].mxu0
        %v1425 = vadd.f32 0.0, %v1424
        %v1426 = vpop.f32.mrb[0].mxu0
        %1427 = vdwg.mxu0
        %1430 = vrot.lane.b32.xlu0 %v1420, 8
        %v1431 = vpop.permute.xlu0 %1430
        %1432 = vrot.lane.b32.xlu0 %v1425, 8
        %v1433 = vpop.permute.xlu0 %1432
        %v1436 = vsel %vm709, %v1420, %v1431
        %v1437 = vsel %vm709, %v1425, %v1433
        %1438 = vrot.lane.b32.xlu0 %v1420, 120
        %v1439 = vpop.permute.xlu0 %1438
        %1440 = vrot.lane.b32.xlu0 %v1425, 120
        %v1441 = vpop.permute.xlu0 %1440
        %v1444 = vsel %vm1343, %v1439, %v1420
        %v1445 = vsel %vm1343, %v1441, %v1425
        %v1446 = vld [vmem:[%s4] sm:$0x1]
        %v1447 = vlaneseq
        %v1448 = vshrl.u32 %v1447, 7
        %v1449 = vsub.s32 0, %v1448
        %v1450 = vrot.slane %v1446, %v1449
        %v1451 = vmul.f32 %v1436, %v1450
        %v1452 = vmul.f32 %v1437, %v1450
        %v1453 = vld [vmem:[%s5] sm:$0x1]
        %v1454 = vlaneseq
        %v1455 = vshrl.u32 %v1454, 7
        %v1456 = vsub.s32 0, %v1455
        %v1457 = vrot.slane %v1453, %v1456
        %v1458 = vmul.f32 %v1420, %v1457
        %v1459 = vmul.f32 %v1425, %v1457
        %v1460 = vadd.f32 %v1451, %v1458
        %v1461 = vadd.f32 %v1452, %v1459
        %v1462 = vld [vmem:[%s4 + $0x1] sm:$0x1]
        %v1463 = vlaneseq
        %v1464 = vshrl.u32 %v1463, 7
        %v1465 = vsub.s32 0, %v1464
        %v1466 = vrot.slane %v1462, %v1465
        %v1467 = vmul.f32 %v1420, %v1466
        %v1468 = vmul.f32 %v1425, %v1466
        %v1469 = vld [vmem:[%s5 + $0x1] sm:$0x1]
        %v1470 = vlaneseq
        %v1471 = vshrl.u32 %v1470, 7
        %v1472 = vsub.s32 0, %v1471
        %v1473 = vrot.slane %v1469, %v1472
        %v1474 = vmul.f32 %v1444, %v1473
        %v1475 = vmul.f32 %v1445, %v1473
        %v1476 = vadd.f32 %v1467, %v1474
        %v1477 = vadd.f32 %v1468, %v1475
        %1480 = vrot.lane.b32.xlu0 %v1476, 64
        %v1481 = vpop.permute.xlu0 %1480
        %1482 = vrot.lane.b32.xlu0 %v1477, 64
        %v1483 = vpop.permute.xlu0 %1482
        %vm1486 = vcmask 523264
        %v1487 = vsel %vm1486, %v1460, %v1481
        %v1488 = vsel %vm1486, %v1461, %v1483
        %1489 = vst [vmem:[%s488] sm:$0xff] %v1487
        %1490 = vst [vmem:[%s488 + $0x8] sm:$0xff] %v1488
        %s1491 = sand.u32 %s159, 1
        %s1492 = scalar_lea.sflag [#allocation5], %s1491
        %s1493 = sand.u32 %s159, 1
        %s1494 = smul.addr %s1493, 16
        %s1495 = scalar_lea.vmem [#allocation4], %s1494
        // Predicated region
        $region83: #{tpu_custom_call.1} parent=77 // pred_check
          %p1496 = pneg %p169
        $region84: #{tpu_custom_call.1} parent=77 // pred_check_branch
          %1498 = sbr.rel (%p1496) target = $region86
        $region85: #{tpu_custom_call.1} parent=77 // pred_region
          %s1500 = ssub.s32 256, 256
          %1501 = vsyncadd %s1492, %s1500
          %s1502 = smul.addr %s20, 2
          %s1503 = smul.addr %s1502, 128
          %s1504 = scalar_lea.hbm %s6, %s1503
          %s1505 = sshll.u32 %s1495, 4
          %s1506 = int_to_ptr.vmem [resolvable:$true] %s1505
          %1511 = dma.vmem_to_hbm [thread:$0]  %s1506, 256, %s1504, %s1492, 128, 128, 8
        $region86: #{tpu_custom_call.1} parent=77 // pred_fallthru
          _
      $region78: #{tpu_custom_call.1} parent=5 // pred_fallthru
        _
      %p1512 = scmp.le.s32.totalorder 2, %s15
      // Predicated region
      $region87: #{tpu_custom_call.1} parent=5 // pred_check
        %p1513 = pneg %p1512
      $region88: #{tpu_custom_call.1} parent=5 // pred_check_branch
        %1515 = sbr.rel (%p1513) target = $region90
      $region89: #{tpu_custom_call.1} parent=5 // pred_region
        %s1516 = ssub.s32 %s15, 2
        // Predicated region
        $region91: #{tpu_custom_call.1} parent=89 // pred_check
          %p1517 = pneg %p175
        $region92: #{tpu_custom_call.1} parent=89 // pred_check_branch
          %1519 = sbr.rel (%p1517) target = $region94
        $region93: #{tpu_custom_call.1} parent=89 // pred_region
          %s1520 = sand.u32 %s160, 1
          %s1521 = scalar_lea.sflag [#allocation5], %s1520
          %s1522 = sand.u32 %s160, 1
          %s1523 = smul.addr %s1522, 16
          %s1524 = scalar_lea.vmem [#allocation4], %s1523
          %1525 = dma.done %s1521, 256
        $region94: #{tpu_custom_call.1} parent=89 // pred_fallthru
          _
      $region90: #{tpu_custom_call.1} parent=5 // pred_fallthru
        _
    $region6: #{tpu_custom_call.1} parent=1 // loop_footer
      %s19 = sadd.s32 1, %s15
    $region7: #{tpu_custom_call.1} parent=1 // loop_footer_branch
      %14 = sbr.rel target = $region3
    $region8: #{tpu_custom_call.1} parent=1 // loop_exit
      _
    %1526 = vsyncpa [#allocation5], 1
    %s1527 = scalar_lea.sflag [#allocation5], 1
    %1528 = vsyncpa %s1527, 1

</llo_original>
